<compile_context>
chip_gen: v7x
topology: tpu7x:2x2x1
jax: 0.10.0
libtpu: 0.0.40
codegen_flags: <defaults>
</compile_context>

<pallas_src>
import math

import jax
import jax.numpy as jnp
from jax import lax
from jax.experimental import pallas as pl
from jax.experimental.pallas import tpu as pltpu

_INV_SQRT2 = 1.0 / math.sqrt(2.0)


def _ffn_kernel(x_ref, w1_ref, b1_ref, w2_ref, b2_ref, o_ref, acc_ref):
    """One (row_tile, d_ff_tile) step of out = gelu(x @ W1 + b1) @ W2 + b2."""
    k = pl.program_id(1)

    @pl.when(k == 0)
    def _():
        acc_ref[...] = jnp.zeros_like(acc_ref)

    # (tm, d_model) @ (d_model, tk) on the MXU, f32 accumulation.  Inputs are
    # fed in their native dtype (bf16 stays bf16 -> headline MXU rate).
    h = jnp.dot(x_ref[...], w1_ref[...], preferred_element_type=jnp.float32)
    h = h + b1_ref[...].astype(jnp.float32)

    # Exact (erf-based) GELU in f32 — matches torch.nn.functional.gelu default.
    h = 0.5 * h * (1.0 + lax.erf(h * _INV_SQRT2))

    # Partial second matmul over this d_ff tile; accumulate in f32 scratch.
    acc_ref[...] += jnp.dot(h.astype(w2_ref.dtype), w2_ref[...],
                            preferred_element_type=jnp.float32)

    @pl.when(k == pl.num_programs(1) - 1)
    def _():
        o_ref[...] = (acc_ref[...] + b2_ref[...].astype(jnp.float32)).astype(o_ref.dtype)


def _round_up(x, m):
    return (x + m - 1) // m * m


def feed_forward(x, w1, b1, w2, b2, *, row_tile=256, ff_tile=512,
                 vmem_limit_bytes=None):
    """x: (B, S, d_model); w1: (d_model, d_ff); b1: (d_ff,); w2: (d_ff, d_model); b2: (d_model,)."""
    B, S, d_model = x.shape
    d_ff = w1.shape[1]
    assert w1.shape == (d_model, d_ff)
    assert w2.shape == (d_ff, d_model)

    M = B * S
    # Large row tile for MXU utilization / low per-step overhead, clamped for
    # tiny inputs; rows padded instead of asserting divisibility.
    tm = min(row_tile, _round_up(M, 8))
    M_pad = _round_up(M, tm)

    # d_ff tile: lane-aligned; fall back to full d_ff if it does not divide.
    tk = min(ff_tile, d_ff)
    if d_ff % tk != 0 or tk % 128 != 0:
        tk = d_ff
    n_k = d_ff // tk

    x2 = x.reshape(M, d_model)
    if M_pad != M:
        x2 = jnp.pad(x2, ((0, M_pad - M), (0, 0)))

    b1_2 = b1.reshape(1, d_ff)
    b2_2 = b2.reshape(1, d_model)

    grid = (M_pad // tm, n_k)

    # Raise the scoped VMEM limit, leaving headroom below physical capacity.
    if vmem_limit_bytes is None:
        try:
            cap = pltpu.get_tpu_info().vmem_capacity_bytes
        except Exception:
            cap = 64 << 20
        vmem_limit_bytes = min(100 << 20, int(cap * 0.85))

    itemsize = x.dtype.itemsize
    flops = 2 * M_pad * d_model * d_ff * 2  # two matmuls
    bytes_accessed = (
        M_pad * d_model * itemsize * 2  # x in + out
        + grid[0] * (w1.size * w1.dtype.itemsize + w2.size * w2.dtype.itemsize
                     + b1.size * b1.dtype.itemsize + b2.size * b2.dtype.itemsize)
    )
    cost = pl.CostEstimate(flops=flops, transcendentals=M_pad * d_ff,
                           bytes_accessed=bytes_accessed)

    out2 = pl.pallas_call(
        _ffn_kernel,
        out_shape=jax.ShapeDtypeStruct((M_pad, d_model), x.dtype),
        grid_spec=pltpu.PrefetchScalarGridSpec(
            num_scalar_prefetch=0,
            grid=grid,
            in_specs=[
                pl.BlockSpec((tm, d_model), lambda i, k: (i, 0)),   # x row tile
                pl.BlockSpec((d_model, tk), lambda i, k: (0, k)),   # W1 column tile
                pl.BlockSpec((1, tk),       lambda i, k: (0, k)),   # b1 tile
                pl.BlockSpec((tk, d_model), lambda i, k: (k, 0)),   # W2 row tile
                pl.BlockSpec((1, d_model),  lambda i, k: (0, 0)),   # b2 (grid-invariant)
            ],
            out_specs=pl.BlockSpec((tm, d_model), lambda i, k: (i, 0)),
            scratch_shapes=[pltpu.VMEM((tm, d_model), jnp.float32)],
        ),
        compiler_params=pltpu.CompilerParams(
            dimension_semantics=("parallel", "arbitrary"),
            vmem_limit_bytes=vmem_limit_bytes,
        ),
        cost_estimate=cost,
    )(x2, w1, b1_2, w2, b2_2)

    if M_pad != M:
        out2 = out2[:M]
    return out2.reshape(B, S, d_model)


def init_params(key, d_model, d_ff, dtype=jnp.float32):
    """Mimics nn.Linear default init: uniform(-1/sqrt(fan_in), 1/sqrt(fan_in))."""
    k1, k2, k3, k4 = jax.random.split(key, 4)
    bound1 = 1.0 / math.sqrt(d_model)
    bound2 = 1.0 / math.sqrt(d_ff)
    # Stored as (in_features, out_features) so the kernel uses x @ W directly.
    w1 = jax.random.uniform(k1, (d_model, d_ff), dtype, -bound1, bound1)
    b1 = jax.random.uniform(k2, (d_ff,), dtype, -bound1, bound1)
    w2 = jax.random.uniform(k3, (d_ff, d_model), dtype, -bound2, bound2)
    b2 = jax.random.uniform(k4, (d_model,), dtype, -bound2, bound2)
    return w1, b1, w2, b2


if __name__ == "__main__":
    key = jax.random.PRNGKey(0)
    kx, kp = jax.random.split(key)

    # Small but hardware-friendly shapes: lane-dense d_model (multiple of 128),
    # two row tiles (exercises megacore 'parallel' axis) and two d_ff tiles
    # (exercises the accumulator / 'arbitrary' axis).
    B, S, d_model, d_ff = 2, 256, 128, 256
    x = jax.random.normal(kx, (B, S, d_model), jnp.float32)
    w1, b1, w2, b2 = init_params(kp, d_model, d_ff)

    out = feed_forward(x, w1, b1, w2, b2, row_tile=256, ff_tile=128)
    out = jax.block_until_ready(out)

    # Pure-JAX reference (exact erf GELU), matmuls at highest precision.
    h_ref = jnp.dot(x, w1, precision=lax.Precision.HIGHEST) + b1
    h_ref = 0.5 * h_ref * (1.0 + lax.erf(h_ref * _INV_SQRT2))
    ref = jnp.dot(h_ref, w2, precision=lax.Precision.HIGHEST) + b2

    assert out.shape == (B, S, d_model)
    err = float(jnp.max(jnp.abs(out - ref)))
    assert jnp.allclose(out, ref, atol=1e-4, rtol=1e-4), f"max abs err {err}"

    print("KERNEL_OK")
</pallas_src>

<mosaic_0001>
module attributes {stable_mosaic.version = 11 : i64} {
  func.func @_ffn_kernel(%arg0: i32, %arg1: i32, %arg2: memref<256x128xf32, #tpu.memory_space<vmem>>, %arg3: memref<128x128xf32, #tpu.memory_space<vmem>>, %arg4: memref<1x128xf32, #tpu.memory_space<vmem>>, %arg5: memref<128x128xf32, #tpu.memory_space<vmem>>, %arg6: memref<1x128xf32, #tpu.memory_space<vmem>>, %arg7: memref<256x128xf32, #tpu.memory_space<vmem>>, %arg8: memref<256x128xf32, #tpu.memory_space<vmem>>) attributes {dimension_semantics = [#tpu.dimension_semantics<parallel>, #tpu.dimension_semantics<arbitrary>], iteration_bounds = array<i64: 2, 2>, scalar_prefetch = 0 : i64, scratch_operands = 1 : i64, tpu.core_type = #tpu.core_type<tc>, window_params = [{transform_indices = @transform_0, window_bounds = array<i64: 256, 128>}, {transform_indices = @transform_1, window_bounds = array<i64: 128, 128>}, {transform_indices = @transform_2, window_bounds = array<i64: 1, 128>}, {transform_indices = @transform_3, window_bounds = array<i64: 128, 128>}, {pipeline_mode = #tpu.pipeline_mode<synchronous>, transform_indices = @transform_4, window_bounds = array<i64: 1, 128>}, {transform_indices = @transform_5, window_bounds = array<i64: 256, 128>}]} {
    %c0_i32 = arith.constant 0 : i32
    %0 = arith.cmpi eq, %arg1, %c0_i32 : i32
    %1 = arith.extui %0 : i1 to i32
    %c0_i32_0 = arith.constant 0 : i32
    %2 = arith.cmpi ne, %1, %c0_i32_0 : i32
    scf.if %2 {
      %cst_17 = arith.constant 0.000000e+00 : f32
      %25 = vector.broadcast %cst_17 : f32 to vector<256x128xf32>
      %c0_18 = arith.constant 0 : index
      %c0_19 = arith.constant 0 : index
      %26 = vector.load %arg8[%c0_18, %c0_19] : memref<256x128xf32, #tpu.memory_space<vmem>>, vector<256x128xf32>
      tpu.vector_store %arg8[%c0_18, %c0_19], %25 {strides = array<i32>} : memref<256x128xf32, #tpu.memory_space<vmem>>, vector<256x128xf32>,
    } else {
    }
    %c0 = arith.constant 0 : index
    %c0_1 = arith.constant 0 : index
    %3 = vector.load %arg2[%c0, %c0_1] : memref<256x128xf32, #tpu.memory_space<vmem>>, vector<256x128xf32>
    %c0_2 = arith.constant 0 : index
    %c0_3 = arith.constant 0 : index
    %4 = vector.load %arg3[%c0_2, %c0_3] : memref<128x128xf32, #tpu.memory_space<vmem>>, vector<128x128xf32>
    %cst = arith.constant dense<0.000000e+00> : vector<256x128xf32>
    %5 = tpu.matmul %3, %4, %cst {dimension_numbers = #tpu.dot_dimension_numbers<[1], [0], [0], [1], [0, 0, 1, 1], [], []>} : vector<256x128xf32>, vector<128x128xf32>, vector<256x128xf32> -> vector<256x128xf32>
    %c0_4 = arith.constant 0 : index
    %c0_5 = arith.constant 0 : index
    %6 = vector.load %arg4[%c0_4, %c0_5] : memref<1x128xf32, #tpu.memory_space<vmem>>, vector<1x128xf32>
    %7 = vector.broadcast %6 : vector<1x128xf32> to vector<256x128xf32>
    %8 = arith.addf %5, %7 : vector<256x128xf32>
    %cst_6 = arith.constant 5.000000e-01 : f32
    %9 = vector.broadcast %cst_6 : f32 to vector<256x128xf32>
    %10 = arith.mulf %9, %8 : vector<256x128xf32>
    %cst_7 = arith.constant 0.707106769 : f32
    %11 = vector.broadcast %cst_7 : f32 to vector<256x128xf32>
    %12 = arith.mulf %8, %11 : vector<256x128xf32>
    %13 = math.erf %12 : vector<256x128xf32>
    %cst_8 = arith.constant 1.000000e+00 : f32
    %14 = vector.broadcast %cst_8 : f32 to vector<256x128xf32>
    %15 = arith.addf %14, %13 : vector<256x128xf32>
    %16 = arith.mulf %10, %15 : vector<256x128xf32>
    %c0_9 = arith.constant 0 : index
    %c0_10 = arith.constant 0 : index
    %17 = vector.load %arg8[%c0_9, %c0_10] : memref<256x128xf32, #tpu.memory_space<vmem>>, vector<256x128xf32>
    %c0_11 = arith.constant 0 : index
    %c0_12 = arith.constant 0 : index
    %18 = vector.load %arg5[%c0_11, %c0_12] : memref<128x128xf32, #tpu.memory_space<vmem>>, vector<128x128xf32>
    %cst_13 = arith.constant dense<0.000000e+00> : vector<256x128xf32>
    %19 = tpu.matmul %16, %18, %cst_13 {dimension_numbers = #tpu.dot_dimension_numbers<[1], [0], [0], [1], [0, 0, 1, 1], [], []>} : vector<256x128xf32>, vector<128x128xf32>, vector<256x128xf32> -> vector<256x128xf32>
    %20 = arith.addf %17, %19 : vector<256x128xf32>
    %c0_14 = arith.constant 0 : index
    %c0_15 = arith.constant 0 : index
    %21 = vector.load %arg8[%c0_14, %c0_15] : memref<256x128xf32, #tpu.memory_space<vmem>>, vector<256x128xf32>
    tpu.vector_store %arg8[%c0_14, %c0_15], %20 {strides = array<i32>} : memref<256x128xf32, #tpu.memory_space<vmem>>, vector<256x128xf32>,
    %c1_i32 = arith.constant 1 : i32
    %22 = arith.cmpi eq, %arg1, %c1_i32 : i32
    %23 = arith.extui %22 : i1 to i32
    %c0_i32_16 = arith.constant 0 : i32
    %24 = arith.cmpi ne, %23, %c0_i32_16 : i32
    scf.if %24 {
      %c0_17 = arith.constant 0 : index
      %c0_18 = arith.constant 0 : index
      %25 = vector.load %arg8[%c0_17, %c0_18] : memref<256x128xf32, #tpu.memory_space<vmem>>, vector<256x128xf32>
      %c0_19 = arith.constant 0 : index
      %c0_20 = arith.constant 0 : index
      %26 = vector.load %arg6[%c0_19, %c0_20] : memref<1x128xf32, #tpu.memory_space<vmem>>, vector<1x128xf32>
      %27 = vector.broadcast %26 : vector<1x128xf32> to vector<256x128xf32>
      %28 = arith.addf %25, %27 : vector<256x128xf32>
      %c0_21 = arith.constant 0 : index
      %c0_22 = arith.constant 0 : index
      %29 = vector.load %arg7[%c0_21, %c0_22] : memref<256x128xf32, #tpu.memory_space<vmem>>, vector<256x128xf32>
      tpu.vector_store %arg7[%c0_21, %c0_22], %28 {strides = array<i32>} : memref<256x128xf32, #tpu.memory_space<vmem>>, vector<256x128xf32>,
    } else {
    }
    return
  }
  func.func @transform_0(%arg0: i32, %arg1: i32) -> (i32, i32) {
    %c0_i32 = arith.constant 0 : i32
    %c0_i32_0 = arith.constant 0 : i32
    return %arg0, %c0_i32 : i32, i32
  }
  func.func @transform_1(%arg0: i32, %arg1: i32) -> (i32, i32) {
    %c0_i32 = arith.constant 0 : i32
    %c0_i32_0 = arith.constant 0 : i32
    return %c0_i32, %arg1 : i32, i32
  }
  func.func @transform_2(%arg0: i32, %arg1: i32) -> (i32, i32) {
    %c0_i32 = arith.constant 0 : i32
    %c0_i32_0 = arith.constant 0 : i32
    return %c0_i32, %arg1 : i32, i32
  }
  func.func @transform_3(%arg0: i32, %arg1: i32) -> (i32, i32) {
    %c0_i32 = arith.constant 0 : i32
    %c0_i32_0 = arith.constant 0 : i32
    return %arg1, %c0_i32 : i32, i32
  }
  func.func @transform_4(%arg0: i32, %arg1: i32) -> (i32, i32) {
    %c0_i32 = arith.constant 0 : i32
    %c0_i32_0 = arith.constant 0 : i32
    %c0_i32_1 = arith.constant 0 : i32
    return %c0_i32, %c0_i32_0 : i32, i32
  }
  func.func @transform_5(%arg0: i32, %arg1: i32) -> (i32, i32) {
    %c0_i32 = arith.constant 0 : i32
    %c0_i32_0 = arith.constant 0 : i32
    return %arg0, %c0_i32 : i32, i32
  }
}

</mosaic_0001>

<llo_original>
// kernel: tpu_custom_call.1
$region0: #{tpu_custom_call.1}
  #allocation0 [shape = 'u32[]', space=smem, size = 0x4, offset = 0x4, fixed_abs, tag = 'smem constant byte address 0x4 - core index']
  #allocation1 [shape = 'u32[144,128]{1,0:T(1,128)}', space=vmem, size = 0x12000, scoped, tag = 'internal scratch']
  #allocation2 [shape = 'f32[256,128]{1,0:T(8,128)}', space=vmem, size = 0x20000, scoped, tag = 'scratch operand']
  %s0 = inlined_call_operand.hbm [shape: f32[512,128], index: 0, kind: input, shape index: {}]
  %s1 = inlined_call_operand.hbm [shape: f32[128,256], index: 1, kind: input, shape index: {}]
  %s2 = inlined_call_operand.vmem [shape: f32[1,256], index: 2, kind: input, shape index: {}]
  %s3 = inlined_call_operand.hbm [shape: f32[256,128], index: 3, kind: input, shape index: {}]
  %s4 = inlined_call_operand.vmem [shape: f32[1,128], index: 4, kind: input, shape index: {}]
  %s5 = inlined_call_operand.hbm [shape: f32[512,128], index: 5, kind: output, shape index: {}]
  %s6 = sld [smem:[#allocation0]]
  $region73: #{tpu_custom_call.1} parent=0
    _
  %s8 = ssub.s32 1, %s6
  %s9 = scalar_select 0, %s8, %s6
  $region1: #{tpu_custom_call.1} parent=0
    #allocation3 [shape = 'u8[262144]{0}', space=vmem, size = 0x40000, scoped, tag = 'input window, operand 0']
    #allocation4 [shape = 's32[2]{0}', space=sflag, size = 0x8, scoped, tag = 'scoped memory for tpu_custom_call.1']
    #allocation5 [shape = 's32[2]{0}', space=sflag, size = 0x8, scoped, tag = 'scoped memory for tpu_custom_call.1']
    #allocation6 [shape = 'u8[131072]{0}', space=vmem, size = 0x20000, scoped, tag = 'input window, operand 1']
    #allocation7 [shape = 's32[2]{0}', space=sflag, size = 0x8, scoped, tag = 'scoped memory for tpu_custom_call.1']
    #allocation8 [shape = 'u8[131072]{0}', space=vmem, size = 0x20000, scoped, tag = 'input window, operand 3']
    #allocation9 [shape = 'u8[262144]{0}', space=vmem, size = 0x40000, scoped, tag = 'output window, operand 0']
    %10 = vsyncpa [#allocation4], 0
    %s11 = scalar_lea.sflag [#allocation4], 1
    %12 = vsyncpa %s11, 0
    %13 = vsyncpa [#allocation7], 0
    %s14 = scalar_lea.sflag [#allocation7], 1
    %15 = vsyncpa %s14, 0
    %16 = vsyncpa [#allocation5], 0
    %s17 = scalar_lea.sflag [#allocation5], 1
    %18 = vsyncpa %s17, 0
    loop: start=0, step=1, limit=6
    $region2: #{tpu_custom_call.1} parent=1 // loop_pre_header
      _
    $region3: #{tpu_custom_call.1} parent=1 // loop_header
      %s20 = sphi 0, %s24
      %p21 = scmp.ge.s32.totalorder %s20, 6
      %s27 = sphi 0, %s39
      %s28 = sphi 0, %s35
      %s29 = sphi 0, %s27
      %s30 = sphi 0, %s28
      %s31 = sphi 0, %s29
      %s32 = sphi 0, %s30
      %s42 = sphi 0, %s44
      %s45 = sphi 0, %s42
      %s46 = sphi 0, %s45
      %s62 = sphi 0, %s46
      %s68 = sphi 0, %s70
      %s71 = sphi 0, %s68
      %s72 = sphi 0, %s71
      %s88 = sphi 0, %s72
      %s94 = sphi 0, %s96
      %s97 = sphi 0, %s94
      %s98 = sphi 0, %s97
      %s114 = sphi 0, %s98
      %s120 = sphi 0, %s122
      %s123 = sphi 0, %s120
      %s124 = sphi 0, %s123
      %s140 = sphi 0, %s124
      %s144 = sphi 0, %s144
      %s146 = sphi 0, %s144
      %s147 = sphi 0, %s146
      %s161 = sphi 0, %s147
      %s167 = sphi 0, %s169
      %s170 = sphi 0, %s167
      %s171 = sphi 0, %s170
      %s187 = sphi 0, %s171
    $region4: #{tpu_custom_call.1} parent=1 // loop_header_branch
      %23 = sbr.rel (%p21) target = $region8
    $region5: #{tpu_custom_call.1} parent=1 // loop_body
      %s25 = ssub.s32 %s20, 1
      %s26 = ssub.s32 %s20, 2
      %s33 = sadd.s32 1, %s28
      %p34 = scmp.ge.s32.totalorder %s33, 2
      %s35 = scalar_select %p34, 0, %s33
      %s36 = sadd.s32 1, %s27
      %s37 = scalar_select %p34, %s36, %s27
      %p38 = scmp.ge.s32.totalorder %s37, 2
      %s39 = scalar_select %p38, 0, %s37
      %s40 = ssub.s32 %s27, %s39
      %p41 = scmp.eq.s32.totalorder %s40, 0
      %s43 = sadd.s32 %s42, 1
      %s44 = scalar_select %p41, %s42, %s43
      %p47 = pneg %p41
      %p48 = scmp.eq.s32.totalorder %s20, 3
      %p49 = por %p47, %p48
      %p50 = scmp.ne.s32.totalorder %s42, %s45
      %p51 = scmp.eq.s32.totalorder %s20, 0
      %p52 = por %p50, %p51
      %p53 = scmp.ne.s32.totalorder %s42, %s45
      %p54 = scmp.eq.s32.totalorder %s25, 3
      %p55 = por %p53, %p54
      %p56 = scmp.ne.s32.totalorder %s45, %s46
      %p57 = scmp.eq.s32.totalorder %s25, 0
      %p58 = por %p56, %p57
      %p59 = scmp.ne.s32.totalorder %s45, %s46
      %p60 = scmp.eq.s32.totalorder %s26, 3
      %p61 = por %p59, %p60
      %p63 = scmp.ne.s32.totalorder %s46, %s62
      %p64 = scmp.eq.s32.totalorder %s26, 0
      %p65 = por %p63, %p64
      %s66 = ssub.s32 %s28, %s35
      %p67 = scmp.eq.s32.totalorder %s66, 0
      %s69 = sadd.s32 %s68, 1
      %s70 = scalar_select %p67, %s68, %s69
      %p73 = pneg %p67
      %p74 = scmp.eq.s32.totalorder %s20, 3
      %p75 = por %p73, %p74
      %p76 = scmp.ne.s32.totalorder %s68, %s71
      %p77 = scmp.eq.s32.totalorder %s20, 0
      %p78 = por %p76, %p77
      %p79 = scmp.ne.s32.totalorder %s68, %s71
      %p80 = scmp.eq.s32.totalorder %s25, 3
      %p81 = por %p79, %p80
      %p82 = scmp.ne.s32.totalorder %s71, %s72
      %p83 = scmp.eq.s32.totalorder %s25, 0
      %p84 = por %p82, %p83
      %p85 = scmp.ne.s32.totalorder %s71, %s72
      %p86 = scmp.eq.s32.totalorder %s26, 3
      %p87 = por %p85, %p86
      %p89 = scmp.ne.s32.totalorder %s72, %s88
      %p90 = scmp.eq.s32.totalorder %s26, 0
      %p91 = por %p89, %p90
      %s92 = ssub.s32 %s28, %s35
      %p93 = scmp.eq.s32.totalorder %s92, 0
      %s95 = sadd.s32 %s94, 1
      %s96 = scalar_select %p93, %s94, %s95
      %p99 = pneg %p93
      %p100 = scmp.eq.s32.totalorder %s20, 3
      %p101 = por %p99, %p100
      %p102 = scmp.ne.s32.totalorder %s94, %s97
      %p103 = scmp.eq.s32.totalorder %s20, 0
      %p104 = por %p102, %p103
      %p105 = scmp.ne.s32.totalorder %s94, %s97
      %p106 = scmp.eq.s32.totalorder %s25, 3
      %p107 = por %p105, %p106
      %p108 = scmp.ne.s32.totalorder %s97, %s98
      %p109 = scmp.eq.s32.totalorder %s25, 0
      %p110 = por %p108, %p109
      %p111 = scmp.ne.s32.totalorder %s97, %s98
      %p112 = scmp.eq.s32.totalorder %s26, 3
      %p113 = por %p111, %p112
      %p115 = scmp.ne.s32.totalorder %s98, %s114
      %p116 = scmp.eq.s32.totalorder %s26, 0
      %p117 = por %p115, %p116
      %s118 = ssub.s32 %s28, %s35
      %p119 = scmp.eq.s32.totalorder %s118, 0
      %s121 = sadd.s32 %s120, 1
      %s122 = scalar_select %p119, %s120, %s121
      %p125 = pneg %p119
      %p126 = scmp.eq.s32.totalorder %s20, 3
      %p127 = por %p125, %p126
      %p128 = scmp.ne.s32.totalorder %s120, %s123
      %p129 = scmp.eq.s32.totalorder %s20, 0
      %p130 = por %p128, %p129
      %p131 = scmp.ne.s32.totalorder %s120, %s123
      %p132 = scmp.eq.s32.totalorder %s25, 3
      %p133 = por %p131, %p132
      %p134 = scmp.ne.s32.totalorder %s123, %s124
      %p135 = scmp.eq.s32.totalorder %s25, 0
      %p136 = por %p134, %p135
      %p137 = scmp.ne.s32.totalorder %s123, %s124
      %p138 = scmp.eq.s32.totalorder %s26, 3
      %p139 = por %p137, %p138
      %p141 = scmp.ne.s32.totalorder %s124, %s140
      %p142 = scmp.eq.s32.totalorder %s26, 0
      %p143 = por %p141, %p142
      %s145 = sadd.s32 %s144, 1
      %p148 = scmp.eq.s32.totalorder %s20, 3
      %p149 = scmp.ne.s32.totalorder %s144, %s146
      %p150 = scmp.eq.s32.totalorder %s20, 0
      %p151 = por %p149, %p150
      %p152 = scmp.ne.s32.totalorder %s144, %s146
      %p153 = scmp.eq.s32.totalorder %s25, 3
      %p154 = por %p152, %p153
      %p155 = scmp.ne.s32.totalorder %s146, %s147
      %p156 = scmp.eq.s32.totalorder %s25, 0
      %p157 = por %p155, %p156
      %p158 = scmp.ne.s32.totalorder %s146, %s147
      %p159 = scmp.eq.s32.totalorder %s26, 3
      %p160 = por %p158, %p159
      %p162 = scmp.ne.s32.totalorder %s147, %s161
      %p163 = scmp.eq.s32.totalorder %s26, 0
      %p164 = por %p162, %p163
      %s165 = ssub.s32 %s27, %s39
      %p166 = scmp.eq.s32.totalorder %s165, 0
      %s168 = sadd.s32 %s167, 1
      %s169 = scalar_select %p166, %s167, %s168
      %p172 = pneg %p166
      %p173 = scmp.eq.s32.totalorder %s20, 3
      %p174 = por %p172, %p173
      %p175 = scmp.ne.s32.totalorder %s167, %s170
      %p176 = scmp.eq.s32.totalorder %s20, 0
      %p177 = por %p175, %p176
      %p178 = scmp.ne.s32.totalorder %s167, %s170
      %p179 = scmp.eq.s32.totalorder %s25, 3
      %p180 = por %p178, %p179
      %p181 = scmp.ne.s32.totalorder %s170, %s171
      %p182 = scmp.eq.s32.totalorder %s25, 0
      %p183 = por %p181, %p182
      %p184 = scmp.ne.s32.totalorder %s170, %s171
      %p185 = scmp.eq.s32.totalorder %s26, 3
      %p186 = por %p184, %p185
      %p188 = scmp.ne.s32.totalorder %s171, %s187
      %p189 = scmp.eq.s32.totalorder %s26, 0
      %p190 = por %p188, %p189
      %p191 = scmp.le.s32.totalorder 1, %s20
      %p192 = scmp.lt.s32.totalorder %s20, 5
      %p193 = pnand %p191, %p192
      %p194 = pneg %p193
      // Predicated region
      $region9: #{tpu_custom_call.1} parent=5 // pred_check
        _
      $region10: #{tpu_custom_call.1} parent=5 // pred_check_branch
        %196 = sbr.rel (%p193) target = $region12
      $region11: #{tpu_custom_call.1} parent=5 // pred_region
        %s197 = ssub.s32 %s20, 1
        // Predicated region
        $region13: #{tpu_custom_call.1} parent=11 // pred_check
          %p198 = pneg %p157
        $region14: #{tpu_custom_call.1} parent=11 // pred_check_branch
          %200 = sbr.rel (%p198) target = $region16
        $region15: #{tpu_custom_call.1} parent=11 // pred_region
          _
        $region16: #{tpu_custom_call.1} parent=11 // pred_fallthru
          _
      $region12: #{tpu_custom_call.1} parent=5 // pred_fallthru
        _
      %p201 = scmp.lt.s32.totalorder %s20, 4
      // Predicated region
      $region17: #{tpu_custom_call.1} parent=5 // pred_check
        %p202 = pneg %p201
      $region18: #{tpu_custom_call.1} parent=5 // pred_check_branch
        %204 = sbr.rel (%p202) target = $region20
      $region19: #{tpu_custom_call.1} parent=5 // pred_region
        // Predicated region
        $region21: #{tpu_custom_call.1} parent=19 // pred_check
          %p205 = pneg %p52
        $region22: #{tpu_custom_call.1} parent=19 // pred_check_branch
          %207 = sbr.rel (%p205) target = $region24
        $region23: #{tpu_custom_call.1} parent=19 // pred_region
          %s208 = sand.u32 %s42, 1
          %s209 = scalar_lea.sflag [#allocation4], %s208
          %s210 = sand.u32 %s42, 1
          %s211 = smul.addr %s210, 256
          %s212 = scalar_lea.vmem [#allocation3], %s211
          %s213 = smul.u32 32, %s27
          %s215 = ssub.s32 4096, 4096
          %216 = vsyncadd %s209, %s215
          %s217 = smul.addr %s213, 128
          %s218 = scalar_lea.hbm %s0, %s217
          %s219 = sshll.u32 %s212, 4
          %s220 = int_to_ptr.vmem [resolvable:$true] %s219
          %225 = dma.hbm_to_vmem [thread:$0]  %s218, 4096, %s220, %s209, 128, 128, 8
        $region24: #{tpu_custom_call.1} parent=19 // pred_fallthru
          _
        // Predicated region
        $region25: #{tpu_custom_call.1} parent=19 // pred_check
          %p226 = pneg %p78
        $region26: #{tpu_custom_call.1} parent=19 // pred_check_branch
          %228 = sbr.rel (%p226) target = $region28
        $region27: #{tpu_custom_call.1} parent=19 // pred_region
          %s229 = sand.u32 %s20, 1
          %s230 = scalar_lea.sflag [#allocation7], %s229
          %s231 = sand.u32 %s68, 1
          %s232 = smul.addr %s231, 128
          %s233 = scalar_lea.vmem [#allocation6], %s232
          %s235 = ssub.s32 2048, 2048
          %236 = vsyncadd %s230, %s235
          %s237 = smul.addr %s28, 128
          %s238 = scalar_lea.hbm %s1, %s237
          %s239 = sshll.u32 %s233, 4
          %s240 = int_to_ptr.vmem [resolvable:$true] %s239
          %245 = dma.hbm_to_vmem [thread:$0]  %s238, 2048, %s240, %s230, 256, 128, 8
        $region28: #{tpu_custom_call.1} parent=19 // pred_fallthru
          _
        // Predicated region
        $region29: #{tpu_custom_call.1} parent=19 // pred_check
          %p246 = pneg %p104
        $region30: #{tpu_custom_call.1} parent=19 // pred_check_branch
          %248 = sbr.rel (%p246) target = $region32
        $region31: #{tpu_custom_call.1} parent=19 // pred_region
          %p249 = scmp.lt.s32.totalorder %s28, 1
          %s250 = scalar_select %p249, %s28, 1
          %s251 = scalar_lea.vmem %s2, %s250
        $region32: #{tpu_custom_call.1} parent=19 // pred_fallthru
          _
        // Predicated region
        $region33: #{tpu_custom_call.1} parent=19 // pred_check
          %p252 = pneg %p130
        $region34: #{tpu_custom_call.1} parent=19 // pred_check_branch
          %254 = sbr.rel (%p252) target = $region36
        $region35: #{tpu_custom_call.1} parent=19 // pred_region
          %s255 = sand.u32 %s20, 1
          %s256 = scalar_lea.sflag [#allocation7], %s255
          %s257 = sand.u32 %s120, 1
          %s258 = smul.addr %s257, 128
          %s259 = scalar_lea.vmem [#allocation8], %s258
          %s260 = smul.u32 16, %s28
          %s262 = ssub.s32 2048, 2048
          %263 = vsyncadd %s256, %s262
          %s264 = smul.addr %s260, 128
          %s265 = scalar_lea.hbm %s3, %s264
          %s266 = sshll.u32 %s259, 4
          %s267 = int_to_ptr.vmem [resolvable:$true] %s266
          %272 = dma.hbm_to_vmem [thread:$0]  %s265, 2048, %s267, %s256, 128, 128, 8
        $region36: #{tpu_custom_call.1} parent=19 // pred_fallthru
          _
      $region20: #{tpu_custom_call.1} parent=5 // pred_fallthru
        _
      %p273 = scmp.le.s32.totalorder 1, %s20
      %p274 = scmp.lt.s32.totalorder %s20, 5
      %p275 = pnand %p273, %p274
      %p276 = pneg %p275
      // Predicated region
      $region37: #{tpu_custom_call.1} parent=5 // pred_check
        _
      $region38: #{tpu_custom_call.1} parent=5 // pred_check_branch
        %278 = sbr.rel (%p275) target = $region40
      $region39: #{tpu_custom_call.1} parent=5 // pred_region
        %s279 = ssub.s32 %s20, 1
        %s280 = sand.u32 %s45, 1
        %s281 = scalar_lea.sflag [#allocation4], %s280
        %s282 = sand.u32 %s45, 1
        %s283 = smul.addr %s282, 256
        %s284 = scalar_lea.vmem [#allocation3], %s283
        // Predicated region
        $region41: #{tpu_custom_call.1} parent=39 // pred_check
          %p285 = pneg %p58
        $region42: #{tpu_custom_call.1} parent=39 // pred_check_branch
          %287 = sbr.rel (%p285) target = $region44
        $region43: #{tpu_custom_call.1} parent=39 // pred_region
          %288 = dma.done %s281, 4096
        $region44: #{tpu_custom_call.1} parent=39 // pred_fallthru
          _
        %s289 = sand.u32 %s25, 1
        %s290 = scalar_lea.sflag [#allocation7], %s289
        %s291 = sand.u32 %s71, 1
        %s292 = smul.addr %s291, 128
        %s293 = scalar_lea.vmem [#allocation6], %s292
        // Predicated region
        $region45: #{tpu_custom_call.1} parent=39 // pred_check
          %p294 = pneg %p84
        $region46: #{tpu_custom_call.1} parent=39 // pred_check_branch
          %296 = sbr.rel (%p294) target = $region48
        $region47: #{tpu_custom_call.1} parent=39 // pred_region
          %297 = dma.done %s290, 2048
        $region48: #{tpu_custom_call.1} parent=39 // pred_fallthru
          _
        %s298 = sand.u32 %s25, 1
        %s299 = scalar_lea.sflag [#allocation7], %s298
        %s300 = sand.u32 %s123, 1
        %s301 = smul.addr %s300, 128
        %s302 = scalar_lea.vmem [#allocation8], %s301
        // Predicated region
        $region49: #{tpu_custom_call.1} parent=39 // pred_check
          %p303 = pneg %p136
        $region50: #{tpu_custom_call.1} parent=39 // pred_check_branch
          %305 = sbr.rel (%p303) target = $region52
        $region51: #{tpu_custom_call.1} parent=39 // pred_region
          %306 = dma.done %s299, 2048
        $region52: #{tpu_custom_call.1} parent=39 // pred_fallthru
          _
        %s307 = sand.u32 %s45, 1
        %s308 = scalar_lea.sflag [#allocation4], %s307
        %s309 = sand.u32 %s45, 1
        %s310 = smul.addr %s309, 256
        %s311 = scalar_lea.vmem [#allocation3], %s310
        %p312 = pneg %p58
        %p313 = pneg %p55
        %s314 = sand.u32 %s25, 1
        %s315 = scalar_lea.sflag [#allocation7], %s314
        %s316 = sand.u32 %s71, 1
        %s317 = smul.addr %s316, 128
        %s318 = scalar_lea.vmem [#allocation6], %s317
        %p319 = pneg %p84
        %p320 = pneg %p81
        %p321 = scmp.lt.s32.totalorder %s30, 1
        %s322 = scalar_select %p321, %s30, 1
        %s323 = scalar_lea.vmem %s2, %s322
        %p324 = pneg %p110
        %p325 = pneg %p107
        %s326 = sand.u32 %s25, 1
        %s327 = scalar_lea.sflag [#allocation7], %s326
        %s328 = sand.u32 %s123, 1
        %s329 = smul.addr %s328, 128
        %s330 = scalar_lea.vmem [#allocation8], %s329
        %p331 = pneg %p136
        %p332 = pneg %p133
        %p333 = pneg %p157
        %p334 = pneg %p154
        %p335 = pneg %p183
        %p336 = pneg %p180
        %s337 = sand.u32 %s170, 1
        %s338 = scalar_lea.sflag [#allocation5], %s337
        %s339 = sand.u32 %s170, 1
        %s340 = smul.addr %s339, 256
        %s341 = scalar_lea.vmem [#allocation9], %s340
        %s342 = smul.u32 32, %s29
        %p343 = scmp.lt.s32.totalorder %s30, 1
        %s344 = scalar_select %p343, %s30, 1
        %s345 = scalar_lea.vmem %s2, %s344
        %s346 = smul.u32 16, %s30
        %s347 = smul.u32 32, %s29
        %p348 = scmp.eq.s32.totalorder %s30, 0
        // Predicated region
        $region53: #{tpu_custom_call.1} parent=39 // pred_check
          %p349 = pneg %p348
        $region54: #{tpu_custom_call.1} parent=39 // pred_check_branch
          %351 = sbr.rel (%p349) target = $region56
        $region55: #{tpu_custom_call.1} parent=39 // pred_region
          %352 = vst [vmem:[#allocation2] sm:$0xff] 0.0
          %353 = vst [vmem:[#allocation2 + $0x8] sm:$0xff] 0.0
          %354 = vst [vmem:[#allocation2 + $0x10] sm:$0xff] 0.0
          %355 = vst [vmem:[#allocation2 + $0x18] sm:$0xff] 0.0
          %356 = vst [vmem:[#allocation2 + $0x20] sm:$0xff] 0.0
          %357 = vst [vmem:[#allocation2 + $0x28] sm:$0xff] 0.0
          %358 = vst [vmem:[#allocation2 + $0x30] sm:$0xff] 0.0
          %359 = vst [vmem:[#allocation2 + $0x38] sm:$0xff] 0.0
          %360 = vst [vmem:[#allocation2 + $0x40] sm:$0xff] 0.0
          %361 = vst [vmem:[#allocation2 + $0x48] sm:$0xff] 0.0
          %362 = vst [vmem:[#allocation2 + $0x50] sm:$0xff] 0.0
          %363 = vst [vmem:[#allocation2 + $0x58] sm:$0xff] 0.0
          %364 = vst [vmem:[#allocation2 + $0x60] sm:$0xff] 0.0
          %365 = vst [vmem:[#allocation2 + $0x68] sm:$0xff] 0.0
          %366 = vst [vmem:[#allocation2 + $0x70] sm:$0xff] 0.0
          %367 = vst [vmem:[#allocation2 + $0x78] sm:$0xff] 0.0
          %368 = vst [vmem:[#allocation2 + $0x80] sm:$0xff] 0.0
          %369 = vst [vmem:[#allocation2 + $0x88] sm:$0xff] 0.0
          %370 = vst [vmem:[#allocation2 + $0x90] sm:$0xff] 0.0
          %371 = vst [vmem:[#allocation2 + $0x98] sm:$0xff] 0.0
          %372 = vst [vmem:[#allocation2 + $0xa0] sm:$0xff] 0.0
          %373 = vst [vmem:[#allocation2 + $0xa8] sm:$0xff] 0.0
          %374 = vst [vmem:[#allocation2 + $0xb0] sm:$0xff] 0.0
          %375 = vst [vmem:[#allocation2 + $0xb8] sm:$0xff] 0.0
          %376 = vst [vmem:[#allocation2 + $0xc0] sm:$0xff] 0.0
          %377 = vst [vmem:[#allocation2 + $0xc8] sm:$0xff] 0.0
          %378 = vst [vmem:[#allocation2 + $0xd0] sm:$0xff] 0.0
          %379 = vst [vmem:[#allocation2 + $0xd8] sm:$0xff] 0.0
          %380 = vst [vmem:[#allocation2 + $0xe0] sm:$0xff] 0.0
          %381 = vst [vmem:[#allocation2 + $0xe8] sm:$0xff] 0.0
          %382 = vst [vmem:[#allocation2 + $0xf0] sm:$0xff] 0.0
          %383 = vst [vmem:[#allocation2 + $0xf8] sm:$0xff] 0.0
        $region56: #{tpu_custom_call.1} parent=39 // pred_fallthru
          _
        %v384 = vld [vmem:[%s284] sm:$0xff]
        %v385 = vld [vmem:[%s284 + $0x8] sm:$0xff]
        %v386 = vld [vmem:[%s284 + $0x10] sm:$0xff]
        %v387 = vld [vmem:[%s284 + $0x18] sm:$0xff]
        %v388 = vld [vmem:[%s284 + $0x20] sm:$0xff]
        %v389 = vld [vmem:[%s284 + $0x28] sm:$0xff]
        %v390 = vld [vmem:[%s284 + $0x30] sm:$0xff]
        %v391 = vld [vmem:[%s284 + $0x38] sm:$0xff]
        %v392 = vld [vmem:[%s284 + $0x40] sm:$0xff]
        %v393 = vld [vmem:[%s284 + $0x48] sm:$0xff]
        %v394 = vld [vmem:[%s284 + $0x50] sm:$0xff]
        %v395 = vld [vmem:[%s284 + $0x58] sm:$0xff]
        %v396 = vld [vmem:[%s284 + $0x60] sm:$0xff]
        %v397 = vld [vmem:[%s284 + $0x68] sm:$0xff]
        %v398 = vld [vmem:[%s284 + $0x70] sm:$0xff]
        %v399 = vld [vmem:[%s284 + $0x78] sm:$0xff]
        %v400 = vld [vmem:[%s284 + $0x80] sm:$0xff]
        %v401 = vld [vmem:[%s284 + $0x88] sm:$0xff]
        %v402 = vld [vmem:[%s284 + $0x90] sm:$0xff]
        %v403 = vld [vmem:[%s284 + $0x98] sm:$0xff]
        %v404 = vld [vmem:[%s284 + $0xa0] sm:$0xff]
        %v405 = vld [vmem:[%s284 + $0xa8] sm:$0xff]
        %v406 = vld [vmem:[%s284 + $0xb0] sm:$0xff]
        %v407 = vld [vmem:[%s284 + $0xb8] sm:$0xff]
        %v408 = vld [vmem:[%s284 + $0xc0] sm:$0xff]
        %v409 = vld [vmem:[%s284 + $0xc8] sm:$0xff]
        %v410 = vld [vmem:[%s284 + $0xd0] sm:$0xff]
        %v411 = vld [vmem:[%s284 + $0xd8] sm:$0xff]
        %v412 = vld [vmem:[%s284 + $0xe0] sm:$0xff]
        %v413 = vld [vmem:[%s284 + $0xe8] sm:$0xff]
        %v414 = vld [vmem:[%s284 + $0xf0] sm:$0xff]
        %v415 = vld [vmem:[%s284 + $0xf8] sm:$0xff]
        %v416 = vld [vmem:[%s293] sm:$0xff]
        %v417 = vld [vmem:[%s293 + $0x8] sm:$0xff]
        %v418 = vld [vmem:[%s293 + $0x10] sm:$0xff]
        %v419 = vld [vmem:[%s293 + $0x18] sm:$0xff]
        %v420 = vld [vmem:[%s293 + $0x20] sm:$0xff]
        %v421 = vld [vmem:[%s293 + $0x28] sm:$0xff]
        %v422 = vld [vmem:[%s293 + $0x30] sm:$0xff]
        %v423 = vld [vmem:[%s293 + $0x38] sm:$0xff]
        %v424 = vld [vmem:[%s293 + $0x40] sm:$0xff]
        %v425 = vld [vmem:[%s293 + $0x48] sm:$0xff]
        %v426 = vld [vmem:[%s293 + $0x50] sm:$0xff]
        %v427 = vld [vmem:[%s293 + $0x58] sm:$0xff]
        %v428 = vld [vmem:[%s293 + $0x60] sm:$0xff]
        %v429 = vld [vmem:[%s293 + $0x68] sm:$0xff]
        %v430 = vld [vmem:[%s293 + $0x70] sm:$0xff]
        %v431 = vld [vmem:[%s293 + $0x78] sm:$0xff]
        %v432 = vld [vmem:[%s345] sm:$0x1]
        %v434 = vlaneseq
        %v435 = vshrl.u32 %v434, 7
        %v436 = vsub.s32 0, %v435
        %v437 = vrot.slane %v432, %v436
        %439 = vmatprep.subr.mxu0 0.0
        %440 = vmatpush1.msra.mxu0 %v416
        %441 = vmatprep.subr.mxu0 0.0
        %442 = vmatpush1.msra.mxu0 %v417
        %443 = vmatprep.subr.mxu0 0.0
        %444 = vmatpush1.msra.mxu0 %v418
        %445 = vmatprep.subr.mxu0 0.0
        %446 = vmatpush1.msra.mxu0 %v419
        %447 = vmatprep.subr.mxu0 0.0
        %448 = vmatpush1.msra.mxu0 %v420
        %449 = vmatprep.subr.mxu0 0.0
        %450 = vmatpush1.msra.mxu0 %v421
        %451 = vmatprep.subr.mxu0 0.0
        %452 = vmatpush1.msra.mxu0 %v422
        %453 = vmatprep.subr.mxu0 0.0
        %454 = vmatpush1.msra.mxu0 %v423
        %455 = vmatprep.subr.mxu0 0.0
        %456 = vmatpush1.msra.mxu0 %v424
        %457 = vmatprep.subr.mxu0 0.0
        %458 = vmatpush1.msra.mxu0 %v425
        %459 = vmatprep.subr.mxu0 0.0
        %460 = vmatpush1.msra.mxu0 %v426
        %461 = vmatprep.subr.mxu0 0.0
        %462 = vmatpush1.msra.mxu0 %v427
        %463 = vmatprep.subr.mxu0 0.0
        %464 = vmatpush1.msra.mxu0 %v428
        %465 = vmatprep.subr.mxu0 0.0
        %466 = vmatpush1.msra.mxu0 %v429
        %467 = vmatprep.subr.mxu0 0.0
        %468 = vmatpush1.msra.mxu0 %v430
        %469 = vmatprep.subr.mxu0 0.0
        %470 = vmatpush1.msra.mxu0 %v431
        %471 = vmatprep.subr.mxu0 0.0
        %472 = vmatpush1.msra.mxu0 0.0
        %473 = vmatprep.subr.mxu0 0.0
        %474 = vmatpush1.msra.mxu0 0.0
        %475 = vmatprep.subr.mxu0 0.0
        %476 = vmatpush1.msra.mxu0 0.0
        %477 = vmatprep.subr.mxu0 0.0
        %478 = vmatpush1.msra.mxu0 0.0
        %479 = vmatprep.subr.mxu0 0.0
        %480 = vmatpush1.msra.mxu0 0.0
        %481 = vmatprep.subr.mxu0 0.0
        %482 = vmatpush1.msra.mxu0 0.0
        %483 = vmatprep.subr.mxu0 0.0
        %484 = vmatpush1.msra.mxu0 0.0
        %485 = vmatprep.subr.mxu0 0.0
        %486 = vmatpush1.msra.mxu0 0.0
        %487 = vmatprep.subr.mxu0 0.0
        %488 = vmatpush1.msra.mxu0 0.0
        %489 = vmatprep.subr.mxu0 0.0
        %490 = vmatpush1.msra.mxu0 0.0
        %491 = vmatprep.subr.mxu0 0.0
        %492 = vmatpush1.msra.mxu0 0.0
        %493 = vmatprep.subr.mxu0 0.0
        %494 = vmatpush1.msra.mxu0 0.0
        %495 = vmatprep.subr.mxu0 0.0
        %496 = vmatpush1.msra.mxu0 0.0
        %497 = vmatprep.subr.mxu0 0.0
        %498 = vmatpush1.msra.mxu0 0.0
        %499 = vmatprep.subr.mxu0 0.0
        %500 = vmatpush1.msra.mxu0 0.0
        %501 = vmatprep.subr.mxu0 0.0
        %502 = vmatpush1.msra.mxu0 0.0
        %503 = vmatprep.mubr.f32.mxu0 0.0
        %504 = vmatmul.mubr.f32.gmra.mrb[0].mxu0 %v384
        %v505 = vpop.f32.mrb[0].mxu0
        %v506 = vadd.f32 %v437, %v505
        %v507 = vpop.f32.mrb[0].mxu0
        %508 = vmatprep.mubr.f32.mxu0 0.0
        %509 = vmatmul.mubr.f32.gmra.mrb[0].mxu0 %v385
        %v510 = vpop.f32.mrb[0].mxu0
        %v511 = vadd.f32 %v437, %v510
        %v512 = vpop.f32.mrb[0].mxu0
        %513 = vmatprep.mubr.f32.mxu0 0.0
        %514 = vmatmul.mubr.f32.gmra.mrb[0].mxu0 %v386
        %v515 = vpop.f32.mrb[0].mxu0
        %v516 = vadd.f32 %v437, %v515
        %v517 = vpop.f32.mrb[0].mxu0
        %518 = vmatprep.mubr.f32.mxu0 0.0
        %519 = vmatmul.mubr.f32.gmra.mrb[0].mxu0 %v387
        %v520 = vpop.f32.mrb[0].mxu0
        %v521 = vadd.f32 %v437, %v520
        %v522 = vpop.f32.mrb[0].mxu0
        %523 = vmatprep.mubr.f32.mxu0 0.0
        %524 = vmatmul.mubr.f32.gmra.mrb[0].mxu0 %v388
        %v525 = vpop.f32.mrb[0].mxu0
        %v526 = vadd.f32 %v437, %v525
        %v527 = vpop.f32.mrb[0].mxu0
        %528 = vmatprep.mubr.f32.mxu0 0.0
        %529 = vmatmul.mubr.f32.gmra.mrb[0].mxu0 %v389
        %v530 = vpop.f32.mrb[0].mxu0
        %v531 = vadd.f32 %v437, %v530
        %v532 = vpop.f32.mrb[0].mxu0
        %533 = vmatprep.mubr.f32.mxu0 0.0
        %534 = vmatmul.mubr.f32.gmra.mrb[0].mxu0 %v390
        %v535 = vpop.f32.mrb[0].mxu0
        %v536 = vadd.f32 %v437, %v535
        %v537 = vpop.f32.mrb[0].mxu0
        %538 = vmatprep.mubr.f32.mxu0 0.0
        %539 = vmatmul.mubr.f32.gmra.mrb[0].mxu0 %v391
        %v540 = vpop.f32.mrb[0].mxu0
        %v541 = vadd.f32 %v437, %v540
        %v542 = vpop.f32.mrb[0].mxu0
        %543 = vmatprep.mubr.f32.mxu0 0.0
        %544 = vmatmul.mubr.f32.gmra.mrb[0].mxu0 %v392
        %v545 = vpop.f32.mrb[0].mxu0
        %v546 = vadd.f32 %v437, %v545
        %v547 = vpop.f32.mrb[0].mxu0
        %548 = vmatprep.mubr.f32.mxu0 0.0
        %549 = vmatmul.mubr.f32.gmra.mrb[0].mxu0 %v393
        %v550 = vpop.f32.mrb[0].mxu0
        %v551 = vadd.f32 %v437, %v550
        %v552 = vpop.f32.mrb[0].mxu0
        %553 = vmatprep.mubr.f32.mxu0 0.0
        %554 = vmatmul.mubr.f32.gmra.mrb[0].mxu0 %v394
        %v555 = vpop.f32.mrb[0].mxu0
        %v556 = vadd.f32 %v437, %v555
        %v557 = vpop.f32.mrb[0].mxu0
        %558 = vmatprep.mubr.f32.mxu0 0.0
        %559 = vmatmul.mubr.f32.gmra.mrb[0].mxu0 %v395
        %v560 = vpop.f32.mrb[0].mxu0
        %v561 = vadd.f32 %v437, %v560
        %v562 = vpop.f32.mrb[0].mxu0
        %563 = vmatprep.mubr.f32.mxu0 0.0
        %564 = vmatmul.mubr.f32.gmra.mrb[0].mxu0 %v396
        %v565 = vpop.f32.mrb[0].mxu0
        %v566 = vadd.f32 %v437, %v565
        %v567 = vpop.f32.mrb[0].mxu0
        %568 = vmatprep.mubr.f32.mxu0 0.0
        %569 = vmatmul.mubr.f32.gmra.mrb[0].mxu0 %v397
        %v570 = vpop.f32.mrb[0].mxu0
        %v571 = vadd.f32 %v437, %v570
        %v572 = vpop.f32.mrb[0].mxu0
        %573 = vmatprep.mubr.f32.mxu0 0.0
        %574 = vmatmul.mubr.f32.gmra.mrb[0].mxu0 %v398
        %v575 = vpop.f32.mrb[0].mxu0
        %v576 = vadd.f32 %v437, %v575
        %v577 = vpop.f32.mrb[0].mxu0
        %578 = vmatprep.mubr.f32.mxu0 0.0
        %579 = vmatmul.mubr.f32.gmra.mrb[0].mxu0 %v399
        %v580 = vpop.f32.mrb[0].mxu0
        %v581 = vadd.f32 %v437, %v580
        %v582 = vpop.f32.mrb[0].mxu0
        %583 = vmatprep.mubr.f32.mxu0 0.0
        %584 = vmatmul.mubr.f32.gmra.mrb[0].mxu0 %v400
        %v585 = vpop.f32.mrb[0].mxu0
        %v586 = vadd.f32 %v437, %v585
        %v587 = vpop.f32.mrb[0].mxu0
        %588 = vmatprep.mubr.f32.mxu0 0.0
        %589 = vmatmul.mubr.f32.gmra.mrb[0].mxu0 %v401
        %v590 = vpop.f32.mrb[0].mxu0
        %v591 = vadd.f32 %v437, %v590
        %v592 = vpop.f32.mrb[0].mxu0
        %593 = vmatprep.mubr.f32.mxu0 0.0
        %594 = vmatmul.mubr.f32.gmra.mrb[0].mxu0 %v402
        %v595 = vpop.f32.mrb[0].mxu0
        %v596 = vadd.f32 %v437, %v595
        %v597 = vpop.f32.mrb[0].mxu0
        %598 = vmatprep.mubr.f32.mxu0 0.0
        %599 = vmatmul.mubr.f32.gmra.mrb[0].mxu0 %v403
        %v600 = vpop.f32.mrb[0].mxu0
        %v601 = vadd.f32 %v437, %v600
        %v602 = vpop.f32.mrb[0].mxu0
        %603 = vmatprep.mubr.f32.mxu0 0.0
        %604 = vmatmul.mubr.f32.gmra.mrb[0].mxu0 %v404
        %v605 = vpop.f32.mrb[0].mxu0
        %v606 = vadd.f32 %v437, %v605
        %v607 = vpop.f32.mrb[0].mxu0
        %608 = vmatprep.mubr.f32.mxu0 0.0
        %609 = vmatmul.mubr.f32.gmra.mrb[0].mxu0 %v405
        %v610 = vpop.f32.mrb[0].mxu0
        %v611 = vadd.f32 %v437, %v610
        %v612 = vpop.f32.mrb[0].mxu0
        %613 = vmatprep.mubr.f32.mxu0 0.0
        %614 = vmatmul.mubr.f32.gmra.mrb[0].mxu0 %v406
        %v615 = vpop.f32.mrb[0].mxu0
        %v616 = vadd.f32 %v437, %v615
        %v617 = vpop.f32.mrb[0].mxu0
        %618 = vmatprep.mubr.f32.mxu0 0.0
        %619 = vmatmul.mubr.f32.gmra.mrb[0].mxu0 %v407
        %v620 = vpop.f32.mrb[0].mxu0
        %v621 = vadd.f32 %v437, %v620
        %v622 = vpop.f32.mrb[0].mxu0
        %623 = vmatprep.mubr.f32.mxu0 0.0
        %624 = vmatmul.mubr.f32.gmra.mrb[0].mxu0 %v408
        %v625 = vpop.f32.mrb[0].mxu0
        %v626 = vadd.f32 %v437, %v625
        %v627 = vpop.f32.mrb[0].mxu0
        %628 = vmatprep.mubr.f32.mxu0 0.0
        %629 = vmatmul.mubr.f32.gmra.mrb[0].mxu0 %v409
        %v630 = vpop.f32.mrb[0].mxu0
        %v631 = vadd.f32 %v437, %v630
        %v632 = vpop.f32.mrb[0].mxu0
        %633 = vmatprep.mubr.f32.mxu0 0.0
        %634 = vmatmul.mubr.f32.gmra.mrb[0].mxu0 %v410
        %v635 = vpop.f32.mrb[0].mxu0
        %v636 = vadd.f32 %v437, %v635
        %v637 = vpop.f32.mrb[0].mxu0
        %638 = vmatprep.mubr.f32.mxu0 0.0
        %639 = vmatmul.mubr.f32.gmra.mrb[0].mxu0 %v411
        %v640 = vpop.f32.mrb[0].mxu0
        %v641 = vadd.f32 %v437, %v640
        %v642 = vpop.f32.mrb[0].mxu0
        %643 = vmatprep.mubr.f32.mxu0 0.0
        %644 = vmatmul.mubr.f32.gmra.mrb[0].mxu0 %v412
        %v645 = vpop.f32.mrb[0].mxu0
        %v646 = vadd.f32 %v437, %v645
        %v647 = vpop.f32.mrb[0].mxu0
        %648 = vmatprep.mubr.f32.mxu0 0.0
        %649 = vmatmul.mubr.f32.gmra.mrb[0].mxu0 %v413
        %v650 = vpop.f32.mrb[0].mxu0
        %v651 = vadd.f32 %v437, %v650
        %v652 = vpop.f32.mrb[0].mxu0
        %653 = vmatprep.mubr.f32.mxu0 0.0
        %654 = vmatmul.mubr.f32.gmra.mrb[0].mxu0 %v414
        %v655 = vpop.f32.mrb[0].mxu0
        %v656 = vadd.f32 %v437, %v655
        %v657 = vpop.f32.mrb[0].mxu0
        %658 = vmatprep.mubr.f32.mxu0 0.0
        %659 = vmatmul.mubr.f32.gmra.mrb[0].mxu0 %v415
        %v660 = vpop.f32.mrb[0].mxu0
        %v661 = vadd.f32 %v437, %v660
        %v662 = vpop.f32.mrb[0].mxu0
        %663 = vdwg.mxu0
        %v664 = vmul.f32 %v506, 0.5
        %v665 = vmul.f32 %v511, 0.5
        %v666 = vmul.f32 %v516, 0.5
        %v667 = vmul.f32 %v521, 0.5
        %v668 = vmul.f32 %v526, 0.5
        %v669 = vmul.f32 %v531, 0.5
        %v670 = vmul.f32 %v536, 0.5
        %v671 = vmul.f32 %v541, 0.5
        %v672 = vmul.f32 %v546, 0.5
        %v673 = vmul.f32 %v551, 0.5
        %v674 = vmul.f32 %v556, 0.5
        %v675 = vmul.f32 %v561, 0.5
        %v676 = vmul.f32 %v566, 0.5
        %v677 = vmul.f32 %v571, 0.5
        %v678 = vmul.f32 %v576, 0.5
        %v679 = vmul.f32 %v581, 0.5
        %v680 = vmul.f32 %v586, 0.5
        %v681 = vmul.f32 %v591, 0.5
        %v682 = vmul.f32 %v596, 0.5
        %v683 = vmul.f32 %v601, 0.5
        %v684 = vmul.f32 %v606, 0.5
        %v685 = vmul.f32 %v611, 0.5
        %v686 = vmul.f32 %v616, 0.5
        %v687 = vmul.f32 %v621, 0.5
        %v688 = vmul.f32 %v626, 0.5
        %v689 = vmul.f32 %v631, 0.5
        %v690 = vmul.f32 %v636, 0.5
        %v691 = vmul.f32 %v641, 0.5
        %v692 = vmul.f32 %v646, 0.5
        %v693 = vmul.f32 %v651, 0.5
        %v694 = vmul.f32 %v656, 0.5
        %v695 = vmul.f32 %v661, 0.5
        %v696 = vmul.f32 %v506, 0.70710677
        %v697 = vmul.f32 %v511, 0.70710677
        %v698 = vmul.f32 %v516, 0.70710677
        %v699 = vmul.f32 %v521, 0.70710677
        %v700 = vmul.f32 %v526, 0.70710677
        %v701 = vmul.f32 %v531, 0.70710677
        %v702 = vmul.f32 %v536, 0.70710677
        %v703 = vmul.f32 %v541, 0.70710677
        %v704 = vmul.f32 %v546, 0.70710677
        %v705 = vmul.f32 %v551, 0.70710677
        %v706 = vmul.f32 %v556, 0.70710677
        %v707 = vmul.f32 %v561, 0.70710677
        %v708 = vmul.f32 %v566, 0.70710677
        %v709 = vmul.f32 %v571, 0.70710677
        %v710 = vmul.f32 %v576, 0.70710677
        %v711 = vmul.f32 %v581, 0.70710677
        %v712 = vmul.f32 %v586, 0.70710677
        %v713 = vmul.f32 %v591, 0.70710677
        %v714 = vmul.f32 %v596, 0.70710677
        %v715 = vmul.f32 %v601, 0.70710677
        %v716 = vmul.f32 %v606, 0.70710677
        %v717 = vmul.f32 %v611, 0.70710677
        %v718 = vmul.f32 %v616, 0.70710677
        %v719 = vmul.f32 %v621, 0.70710677
        %v720 = vmul.f32 %v626, 0.70710677
        %v721 = vmul.f32 %v631, 0.70710677
        %v722 = vmul.f32 %v636, 0.70710677
        %v723 = vmul.f32 %v641, 0.70710677
        %v724 = vmul.f32 %v646, 0.70710677
        %v725 = vmul.f32 %v651, 0.70710677
        %v726 = vmul.f32 %v656, 0.70710677
        %v727 = vmul.f32 %v661, 0.70710677
        %v728 = verf.f32.pop %v696
        %v729 = verf.f32.pop %v697
        %v730 = verf.f32.pop %v698
        %v731 = verf.f32.pop %v699
        %v732 = verf.f32.pop %v700
        %v733 = verf.f32.pop %v701
        %v734 = verf.f32.pop %v702
        %v735 = verf.f32.pop %v703
        %v736 = verf.f32.pop %v704
        %v737 = verf.f32.pop %v705
        %v738 = verf.f32.pop %v706
        %v739 = verf.f32.pop %v707
        %v740 = verf.f32.pop %v708
        %v741 = verf.f32.pop %v709
        %v742 = verf.f32.pop %v710
        %v743 = verf.f32.pop %v711
        %v744 = verf.f32.pop %v712
        %v745 = verf.f32.pop %v713
        %v746 = verf.f32.pop %v714
        %v747 = verf.f32.pop %v715
        %v748 = verf.f32.pop %v716
        %v749 = verf.f32.pop %v717
        %v750 = verf.f32.pop %v718
        %v751 = verf.f32.pop %v719
        %v752 = verf.f32.pop %v720
        %v753 = verf.f32.pop %v721
        %v754 = verf.f32.pop %v722
        %v755 = verf.f32.pop %v723
        %v756 = verf.f32.pop %v724
        %v757 = verf.f32.pop %v725
        %v758 = verf.f32.pop %v726
        %v759 = verf.f32.pop %v727
        %v760 = vadd.f32 %v728, 1.0
        %v761 = vadd.f32 %v729, 1.0
        %v762 = vadd.f32 %v730, 1.0
        %v763 = vadd.f32 %v731, 1.0
        %v764 = vadd.f32 %v732, 1.0
        %v765 = vadd.f32 %v733, 1.0
        %v766 = vadd.f32 %v734, 1.0
        %v767 = vadd.f32 %v735, 1.0
        %v768 = vadd.f32 %v736, 1.0
        %v769 = vadd.f32 %v737, 1.0
        %v770 = vadd.f32 %v738, 1.0
        %v771 = vadd.f32 %v739, 1.0
        %v772 = vadd.f32 %v740, 1.0
        %v773 = vadd.f32 %v741, 1.0
        %v774 = vadd.f32 %v742, 1.0
        %v775 = vadd.f32 %v743, 1.0
        %v776 = vadd.f32 %v744, 1.0
        %v777 = vadd.f32 %v745, 1.0
        %v778 = vadd.f32 %v746, 1.0
        %v779 = vadd.f32 %v747, 1.0
        %v780 = vadd.f32 %v748, 1.0
        %v781 = vadd.f32 %v749, 1.0
        %v782 = vadd.f32 %v750, 1.0
        %v783 = vadd.f32 %v751, 1.0
        %v784 = vadd.f32 %v752, 1.0
        %v785 = vadd.f32 %v753, 1.0
        %v786 = vadd.f32 %v754, 1.0
        %v787 = vadd.f32 %v755, 1.0
        %v788 = vadd.f32 %v756, 1.0
        %v789 = vadd.f32 %v757, 1.0
        %v790 = vadd.f32 %v758, 1.0
        %v791 = vadd.f32 %v759, 1.0
        %v792 = vmul.f32 %v664, %v760
        %v793 = vmul.f32 %v665, %v761
        %v794 = vmul.f32 %v666, %v762
        %v795 = vmul.f32 %v667, %v763
        %v796 = vmul.f32 %v668, %v764
        %v797 = vmul.f32 %v669, %v765
        %v798 = vmul.f32 %v670, %v766
        %v799 = vmul.f32 %v671, %v767
        %v800 = vmul.f32 %v672, %v768
        %v801 = vmul.f32 %v673, %v769
        %v802 = vmul.f32 %v674, %v770
        %v803 = vmul.f32 %v675, %v771
        %v804 = vmul.f32 %v676, %v772
        %v805 = vmul.f32 %v677, %v773
        %v806 = vmul.f32 %v678, %v774
        %v807 = vmul.f32 %v679, %v775
        %v808 = vmul.f32 %v680, %v776
        %v809 = vmul.f32 %v681, %v777
        %v810 = vmul.f32 %v682, %v778
        %v811 = vmul.f32 %v683, %v779
        %v812 = vmul.f32 %v684, %v780
        %v813 = vmul.f32 %v685, %v781
        %v814 = vmul.f32 %v686, %v782
        %v815 = vmul.f32 %v687, %v783
        %v816 = vmul.f32 %v688, %v784
        %v817 = vmul.f32 %v689, %v785
        %v818 = vmul.f32 %v690, %v786
        %v819 = vmul.f32 %v691, %v787
        %v820 = vmul.f32 %v692, %v788
        %v821 = vmul.f32 %v693, %v789
        %v822 = vmul.f32 %v694, %v790
        %v823 = vmul.f32 %v695, %v791
        %v824 = vld [vmem:[#allocation2] sm:$0xff]
        %v825 = vld [vmem:[#allocation2 + $0x8] sm:$0xff]
        %v826 = vld [vmem:[#allocation2 + $0x10] sm:$0xff]
        %v827 = vld [vmem:[#allocation2 + $0x18] sm:$0xff]
        %v828 = vld [vmem:[#allocation2 + $0x20] sm:$0xff]
        %v829 = vld [vmem:[#allocation2 + $0x28] sm:$0xff]
        %v830 = vld [vmem:[#allocation2 + $0x30] sm:$0xff]
        %v831 = vld [vmem:[#allocation2 + $0x38] sm:$0xff]
        %v832 = vld [vmem:[#allocation2 + $0x40] sm:$0xff]
        %v833 = vld [vmem:[#allocation2 + $0x48] sm:$0xff]
        %v834 = vld [vmem:[#allocation2 + $0x50] sm:$0xff]
        %v835 = vld [vmem:[#allocation2 + $0x58] sm:$0xff]
        %v836 = vld [vmem:[#allocation2 + $0x60] sm:$0xff]
        %v837 = vld [vmem:[#allocation2 + $0x68] sm:$0xff]
        %v838 = vld [vmem:[#allocation2 + $0x70] sm:$0xff]
        %v839 = vld [vmem:[#allocation2 + $0x78] sm:$0xff]
        %v840 = vld [vmem:[#allocation2 + $0x80] sm:$0xff]
        %v841 = vld [vmem:[#allocation2 + $0x88] sm:$0xff]
        %v842 = vld [vmem:[#allocation2 + $0x90] sm:$0xff]
        %v843 = vld [vmem:[#allocation2 + $0x98] sm:$0xff]
        %v844 = vld [vmem:[#allocation2 + $0xa0] sm:$0xff]
        %v845 = vld [vmem:[#allocation2 + $0xa8] sm:$0xff]
        %v846 = vld [vmem:[#allocation2 + $0xb0] sm:$0xff]
        %v847 = vld [vmem:[#allocation2 + $0xb8] sm:$0xff]
        %v848 = vld [vmem:[#allocation2 + $0xc0] sm:$0xff]
        %v849 = vld [vmem:[#allocation2 + $0xc8] sm:$0xff]
        %v850 = vld [vmem:[#allocation2 + $0xd0] sm:$0xff]
        %v851 = vld [vmem:[#allocation2 + $0xd8] sm:$0xff]
        %v852 = vld [vmem:[#allocation2 + $0xe0] sm:$0xff]
        %v853 = vld [vmem:[#allocation2 + $0xe8] sm:$0xff]
        %v854 = vld [vmem:[#allocation2 + $0xf0] sm:$0xff]
        %v855 = vld [vmem:[#allocation2 + $0xf8] sm:$0xff]
        %v856 = vld [vmem:[%s302] sm:$0xff]
        %v857 = vld [vmem:[%s302 + $0x8] sm:$0xff]
        %v858 = vld [vmem:[%s302 + $0x10] sm:$0xff]
        %v859 = vld [vmem:[%s302 + $0x18] sm:$0xff]
        %v860 = vld [vmem:[%s302 + $0x20] sm:$0xff]
        %v861 = vld [vmem:[%s302 + $0x28] sm:$0xff]
        %v862 = vld [vmem:[%s302 + $0x30] sm:$0xff]
        %v863 = vld [vmem:[%s302 + $0x38] sm:$0xff]
        %v864 = vld [vmem:[%s302 + $0x40] sm:$0xff]
        %v865 = vld [vmem:[%s302 + $0x48] sm:$0xff]
        %v866 = vld [vmem:[%s302 + $0x50] sm:$0xff]
        %v867 = vld [vmem:[%s302 + $0x58] sm:$0xff]
        %v868 = vld [vmem:[%s302 + $0x60] sm:$0xff]
        %v869 = vld [vmem:[%s302 + $0x68] sm:$0xff]
        %v870 = vld [vmem:[%s302 + $0x70] sm:$0xff]
        %v871 = vld [vmem:[%s302 + $0x78] sm:$0xff]
        %872 = vmatprep.subr.mxu0 0.0
        %873 = vmatpush1.msra.mxu0 %v856
        %874 = vmatprep.subr.mxu0 0.0
        %875 = vmatpush1.msra.mxu0 %v857
        %876 = vmatprep.subr.mxu0 0.0
        %877 = vmatpush1.msra.mxu0 %v858
        %878 = vmatprep.subr.mxu0 0.0
        %879 = vmatpush1.msra.mxu0 %v859
        %880 = vmatprep.subr.mxu0 0.0
        %881 = vmatpush1.msra.mxu0 %v860
        %882 = vmatprep.subr.mxu0 0.0
        %883 = vmatpush1.msra.mxu0 %v861
        %884 = vmatprep.subr.mxu0 0.0
        %885 = vmatpush1.msra.mxu0 %v862
        %886 = vmatprep.subr.mxu0 0.0
        %887 = vmatpush1.msra.mxu0 %v863
        %888 = vmatprep.subr.mxu0 0.0
        %889 = vmatpush1.msra.mxu0 %v864
        %890 = vmatprep.subr.mxu0 0.0
        %891 = vmatpush1.msra.mxu0 %v865
        %892 = vmatprep.subr.mxu0 0.0
        %893 = vmatpush1.msra.mxu0 %v866
        %894 = vmatprep.subr.mxu0 0.0
        %895 = vmatpush1.msra.mxu0 %v867
        %896 = vmatprep.subr.mxu0 0.0
        %897 = vmatpush1.msra.mxu0 %v868
        %898 = vmatprep.subr.mxu0 0.0
        %899 = vmatpush1.msra.mxu0 %v869
        %900 = vmatprep.subr.mxu0 0.0
        %901 = vmatpush1.msra.mxu0 %v870
        %902 = vmatprep.subr.mxu0 0.0
        %903 = vmatpush1.msra.mxu0 %v871
        %904 = vmatprep.subr.mxu0 0.0
        %905 = vmatpush1.msra.mxu0 0.0
        %906 = vmatprep.subr.mxu0 0.0
        %907 = vmatpush1.msra.mxu0 0.0
        %908 = vmatprep.subr.mxu0 0.0
        %909 = vmatpush1.msra.mxu0 0.0
        %910 = vmatprep.subr.mxu0 0.0
        %911 = vmatpush1.msra.mxu0 0.0
        %912 = vmatprep.subr.mxu0 0.0
        %913 = vmatpush1.msra.mxu0 0.0
        %914 = vmatprep.subr.mxu0 0.0
        %915 = vmatpush1.msra.mxu0 0.0
        %916 = vmatprep.subr.mxu0 0.0
        %917 = vmatpush1.msra.mxu0 0.0
        %918 = vmatprep.subr.mxu0 0.0
        %919 = vmatpush1.msra.mxu0 0.0
        %920 = vmatprep.subr.mxu0 0.0
        %921 = vmatpush1.msra.mxu0 0.0
        %922 = vmatprep.subr.mxu0 0.0
        %923 = vmatpush1.msra.mxu0 0.0
        %924 = vmatprep.subr.mxu0 0.0
        %925 = vmatpush1.msra.mxu0 0.0
        %926 = vmatprep.subr.mxu0 0.0
        %927 = vmatpush1.msra.mxu0 0.0
        %928 = vmatprep.subr.mxu0 0.0
        %929 = vmatpush1.msra.mxu0 0.0
        %930 = vmatprep.subr.mxu0 0.0
        %931 = vmatpush1.msra.mxu0 0.0
        %932 = vmatprep.subr.mxu0 0.0
        %933 = vmatpush1.msra.mxu0 0.0
        %934 = vmatprep.subr.mxu0 0.0
        %935 = vmatpush1.msra.mxu0 0.0
        %936 = vmatprep.mubr.f32.mxu0 0.0
        %937 = vmatmul.mubr.f32.gmra.mrb[0].mxu0 %v792
        %v938 = vpop.f32.mrb[0].mxu0
        %v939 = vadd.f32 0.0, %v938
        %v940 = vpop.f32.mrb[0].mxu0
        %941 = vmatprep.mubr.f32.mxu0 0.0
        %942 = vmatmul.mubr.f32.gmra.mrb[0].mxu0 %v793
        %v943 = vpop.f32.mrb[0].mxu0
        %v944 = vadd.f32 0.0, %v943
        %v945 = vpop.f32.mrb[0].mxu0
        %946 = vmatprep.mubr.f32.mxu0 0.0
        %947 = vmatmul.mubr.f32.gmra.mrb[0].mxu0 %v794
        %v948 = vpop.f32.mrb[0].mxu0
        %v949 = vadd.f32 0.0, %v948
        %v950 = vpop.f32.mrb[0].mxu0
        %951 = vmatprep.mubr.f32.mxu0 0.0
        %952 = vmatmul.mubr.f32.gmra.mrb[0].mxu0 %v795
        %v953 = vpop.f32.mrb[0].mxu0
        %v954 = vadd.f32 0.0, %v953
        %v955 = vpop.f32.mrb[0].mxu0
        %956 = vmatprep.mubr.f32.mxu0 0.0
        %957 = vmatmul.mubr.f32.gmra.mrb[0].mxu0 %v796
        %v958 = vpop.f32.mrb[0].mxu0
        %v959 = vadd.f32 0.0, %v958
        %v960 = vpop.f32.mrb[0].mxu0
        %961 = vmatprep.mubr.f32.mxu0 0.0
        %962 = vmatmul.mubr.f32.gmra.mrb[0].mxu0 %v797
        %v963 = vpop.f32.mrb[0].mxu0
        %v964 = vadd.f32 0.0, %v963
        %v965 = vpop.f32.mrb[0].mxu0
        %966 = vmatprep.mubr.f32.mxu0 0.0
        %967 = vmatmul.mubr.f32.gmra.mrb[0].mxu0 %v798
        %v968 = vpop.f32.mrb[0].mxu0
        %v969 = vadd.f32 0.0, %v968
        %v970 = vpop.f32.mrb[0].mxu0
        %971 = vmatprep.mubr.f32.mxu0 0.0
        %972 = vmatmul.mubr.f32.gmra.mrb[0].mxu0 %v799
        %v973 = vpop.f32.mrb[0].mxu0
        %v974 = vadd.f32 0.0, %v973
        %v975 = vpop.f32.mrb[0].mxu0
        %976 = vmatprep.mubr.f32.mxu0 0.0
        %977 = vmatmul.mubr.f32.gmra.mrb[0].mxu0 %v800
        %v978 = vpop.f32.mrb[0].mxu0
        %v979 = vadd.f32 0.0, %v978
        %v980 = vpop.f32.mrb[0].mxu0
        %981 = vmatprep.mubr.f32.mxu0 0.0
        %982 = vmatmul.mubr.f32.gmra.mrb[0].mxu0 %v801
        %v983 = vpop.f32.mrb[0].mxu0
        %v984 = vadd.f32 0.0, %v983
        %v985 = vpop.f32.mrb[0].mxu0
        %986 = vmatprep.mubr.f32.mxu0 0.0
        %987 = vmatmul.mubr.f32.gmra.mrb[0].mxu0 %v802
        %v988 = vpop.f32.mrb[0].mxu0
        %v989 = vadd.f32 0.0, %v988
        %v990 = vpop.f32.mrb[0].mxu0
        %991 = vmatprep.mubr.f32.mxu0 0.0
        %992 = vmatmul.mubr.f32.gmra.mrb[0].mxu0 %v803
        %v993 = vpop.f32.mrb[0].mxu0
        %v994 = vadd.f32 0.0, %v993
        %v995 = vpop.f32.mrb[0].mxu0
        %996 = vmatprep.mubr.f32.mxu0 0.0
        %997 = vmatmul.mubr.f32.gmra.mrb[0].mxu0 %v804
        %v998 = vpop.f32.mrb[0].mxu0
        %v999 = vadd.f32 0.0, %v998
        %v1000 = vpop.f32.mrb[0].mxu0
        %1001 = vmatprep.mubr.f32.mxu0 0.0
        %1002 = vmatmul.mubr.f32.gmra.mrb[0].mxu0 %v805
        %v1003 = vpop.f32.mrb[0].mxu0
        %v1004 = vadd.f32 0.0, %v1003
        %v1005 = vpop.f32.mrb[0].mxu0
        %1006 = vmatprep.mubr.f32.mxu0 0.0
        %1007 = vmatmul.mubr.f32.gmra.mrb[0].mxu0 %v806
        %v1008 = vpop.f32.mrb[0].mxu0
        %v1009 = vadd.f32 0.0, %v1008
        %v1010 = vpop.f32.mrb[0].mxu0
        %1011 = vmatprep.mubr.f32.mxu0 0.0
        %1012 = vmatmul.mubr.f32.gmra.mrb[0].mxu0 %v807
        %v1013 = vpop.f32.mrb[0].mxu0
        %v1014 = vadd.f32 0.0, %v1013
        %v1015 = vpop.f32.mrb[0].mxu0
        %1016 = vmatprep.mubr.f32.mxu0 0.0
        %1017 = vmatmul.mubr.f32.gmra.mrb[0].mxu0 %v808
        %v1018 = vpop.f32.mrb[0].mxu0
        %v1019 = vadd.f32 0.0, %v1018
        %v1020 = vpop.f32.mrb[0].mxu0
        %1021 = vmatprep.mubr.f32.mxu0 0.0
        %1022 = vmatmul.mubr.f32.gmra.mrb[0].mxu0 %v809
        %v1023 = vpop.f32.mrb[0].mxu0
        %v1024 = vadd.f32 0.0, %v1023
        %v1025 = vpop.f32.mrb[0].mxu0
        %1026 = vmatprep.mubr.f32.mxu0 0.0
        %1027 = vmatmul.mubr.f32.gmra.mrb[0].mxu0 %v810
        %v1028 = vpop.f32.mrb[0].mxu0
        %v1029 = vadd.f32 0.0, %v1028
        %v1030 = vpop.f32.mrb[0].mxu0
        %1031 = vmatprep.mubr.f32.mxu0 0.0
        %1032 = vmatmul.mubr.f32.gmra.mrb[0].mxu0 %v811
        %v1033 = vpop.f32.mrb[0].mxu0
        %v1034 = vadd.f32 0.0, %v1033
        %v1035 = vpop.f32.mrb[0].mxu0
        %1036 = vmatprep.mubr.f32.mxu0 0.0
        %1037 = vmatmul.mubr.f32.gmra.mrb[0].mxu0 %v812
        %v1038 = vpop.f32.mrb[0].mxu0
        %v1039 = vadd.f32 0.0, %v1038
        %v1040 = vpop.f32.mrb[0].mxu0
        %1041 = vmatprep.mubr.f32.mxu0 0.0
        %1042 = vmatmul.mubr.f32.gmra.mrb[0].mxu0 %v813
        %v1043 = vpop.f32.mrb[0].mxu0
        %v1044 = vadd.f32 0.0, %v1043
        %v1045 = vpop.f32.mrb[0].mxu0
        %1046 = vmatprep.mubr.f32.mxu0 0.0
        %1047 = vmatmul.mubr.f32.gmra.mrb[0].mxu0 %v814
        %v1048 = vpop.f32.mrb[0].mxu0
        %v1049 = vadd.f32 0.0, %v1048
        %v1050 = vpop.f32.mrb[0].mxu0
        %1051 = vmatprep.mubr.f32.mxu0 0.0
        %1052 = vmatmul.mubr.f32.gmra.mrb[0].mxu0 %v815
        %v1053 = vpop.f32.mrb[0].mxu0
        %v1054 = vadd.f32 0.0, %v1053
        %v1055 = vpop.f32.mrb[0].mxu0
        %1056 = vmatprep.mubr.f32.mxu0 0.0
        %1057 = vmatmul.mubr.f32.gmra.mrb[0].mxu0 %v816
        %v1058 = vpop.f32.mrb[0].mxu0
        %v1059 = vadd.f32 0.0, %v1058
        %v1060 = vpop.f32.mrb[0].mxu0
        %1061 = vmatprep.mubr.f32.mxu0 0.0
        %1062 = vmatmul.mubr.f32.gmra.mrb[0].mxu0 %v817
        %v1063 = vpop.f32.mrb[0].mxu0
        %v1064 = vadd.f32 0.0, %v1063
        %v1065 = vpop.f32.mrb[0].mxu0
        %1066 = vmatprep.mubr.f32.mxu0 0.0
        %1067 = vmatmul.mubr.f32.gmra.mrb[0].mxu0 %v818
        %v1068 = vpop.f32.mrb[0].mxu0
        %v1069 = vadd.f32 0.0, %v1068
        %v1070 = vpop.f32.mrb[0].mxu0
        %1071 = vmatprep.mubr.f32.mxu0 0.0
        %1072 = vmatmul.mubr.f32.gmra.mrb[0].mxu0 %v819
        %v1073 = vpop.f32.mrb[0].mxu0
        %v1074 = vadd.f32 0.0, %v1073
        %v1075 = vpop.f32.mrb[0].mxu0
        %1076 = vmatprep.mubr.f32.mxu0 0.0
        %1077 = vmatmul.mubr.f32.gmra.mrb[0].mxu0 %v820
        %v1078 = vpop.f32.mrb[0].mxu0
        %v1079 = vadd.f32 0.0, %v1078
        %v1080 = vpop.f32.mrb[0].mxu0
        %1081 = vmatprep.mubr.f32.mxu0 0.0
        %1082 = vmatmul.mubr.f32.gmra.mrb[0].mxu0 %v821
        %v1083 = vpop.f32.mrb[0].mxu0
        %v1084 = vadd.f32 0.0, %v1083
        %v1085 = vpop.f32.mrb[0].mxu0
        %1086 = vmatprep.mubr.f32.mxu0 0.0
        %1087 = vmatmul.mubr.f32.gmra.mrb[0].mxu0 %v822
        %v1088 = vpop.f32.mrb[0].mxu0
        %v1089 = vadd.f32 0.0, %v1088
        %v1090 = vpop.f32.mrb[0].mxu0
        %1091 = vmatprep.mubr.f32.mxu0 0.0
        %1092 = vmatmul.mubr.f32.gmra.mrb[0].mxu0 %v823
        %v1093 = vpop.f32.mrb[0].mxu0
        %v1094 = vadd.f32 0.0, %v1093
        %v1095 = vpop.f32.mrb[0].mxu0
        %1096 = vdwg.mxu0
        %v1097 = vadd.f32 %v824, %v939
        %v1098 = vadd.f32 %v825, %v944
        %v1099 = vadd.f32 %v826, %v949
        %v1100 = vadd.f32 %v827, %v954
        %v1101 = vadd.f32 %v828, %v959
        %v1102 = vadd.f32 %v829, %v964
        %v1103 = vadd.f32 %v830, %v969
        %v1104 = vadd.f32 %v831, %v974
        %v1105 = vadd.f32 %v832, %v979
        %v1106 = vadd.f32 %v833, %v984
        %v1107 = vadd.f32 %v834, %v989
        %v1108 = vadd.f32 %v835, %v994
        %v1109 = vadd.f32 %v836, %v999
        %v1110 = vadd.f32 %v837, %v1004
        %v1111 = vadd.f32 %v838, %v1009
        %v1112 = vadd.f32 %v839, %v1014
        %v1113 = vadd.f32 %v840, %v1019
        %v1114 = vadd.f32 %v841, %v1024
        %v1115 = vadd.f32 %v842, %v1029
        %v1116 = vadd.f32 %v843, %v1034
        %v1117 = vadd.f32 %v844, %v1039
        %v1118 = vadd.f32 %v845, %v1044
        %v1119 = vadd.f32 %v846, %v1049
        %v1120 = vadd.f32 %v847, %v1054
        %v1121 = vadd.f32 %v848, %v1059
        %v1122 = vadd.f32 %v849, %v1064
        %v1123 = vadd.f32 %v850, %v1069
        %v1124 = vadd.f32 %v851, %v1074
        %v1125 = vadd.f32 %v852, %v1079
        %v1126 = vadd.f32 %v853, %v1084
        %v1127 = vadd.f32 %v854, %v1089
        %v1128 = vadd.f32 %v855, %v1094
        %1129 = vst [vmem:[#allocation2] sm:$0xff] %v1097
        %1130 = vst [vmem:[#allocation2 + $0x8] sm:$0xff] %v1098
        %1131 = vst [vmem:[#allocation2 + $0x10] sm:$0xff] %v1099
        %1132 = vst [vmem:[#allocation2 + $0x18] sm:$0xff] %v1100
        %1133 = vst [vmem:[#allocation2 + $0x20] sm:$0xff] %v1101
        %1134 = vst [vmem:[#allocation2 + $0x28] sm:$0xff] %v1102
        %1135 = vst [vmem:[#allocation2 + $0x30] sm:$0xff] %v1103
        %1136 = vst [vmem:[#allocation2 + $0x38] sm:$0xff] %v1104
        %1137 = vst [vmem:[#allocation2 + $0x40] sm:$0xff] %v1105
        %1138 = vst [vmem:[#allocation2 + $0x48] sm:$0xff] %v1106
        %1139 = vst [vmem:[#allocation2 + $0x50] sm:$0xff] %v1107
        %1140 = vst [vmem:[#allocation2 + $0x58] sm:$0xff] %v1108
        %1141 = vst [vmem:[#allocation2 + $0x60] sm:$0xff] %v1109
        %1142 = vst [vmem:[#allocation2 + $0x68] sm:$0xff] %v1110
        %1143 = vst [vmem:[#allocation2 + $0x70] sm:$0xff] %v1111
        %1144 = vst [vmem:[#allocation2 + $0x78] sm:$0xff] %v1112
        %1145 = vst [vmem:[#allocation2 + $0x80] sm:$0xff] %v1113
        %1146 = vst [vmem:[#allocation2 + $0x88] sm:$0xff] %v1114
        %1147 = vst [vmem:[#allocation2 + $0x90] sm:$0xff] %v1115
        %1148 = vst [vmem:[#allocation2 + $0x98] sm:$0xff] %v1116
        %1149 = vst [vmem:[#allocation2 + $0xa0] sm:$0xff] %v1117
        %1150 = vst [vmem:[#allocation2 + $0xa8] sm:$0xff] %v1118
        %1151 = vst [vmem:[#allocation2 + $0xb0] sm:$0xff] %v1119
        %1152 = vst [vmem:[#allocation2 + $0xb8] sm:$0xff] %v1120
        %1153 = vst [vmem:[#allocation2 + $0xc0] sm:$0xff] %v1121
        %1154 = vst [vmem:[#allocation2 + $0xc8] sm:$0xff] %v1122
        %1155 = vst [vmem:[#allocation2 + $0xd0] sm:$0xff] %v1123
        %1156 = vst [vmem:[#allocation2 + $0xd8] sm:$0xff] %v1124
        %1157 = vst [vmem:[#allocation2 + $0xe0] sm:$0xff] %v1125
        %1158 = vst [vmem:[#allocation2 + $0xe8] sm:$0xff] %v1126
        %1159 = vst [vmem:[#allocation2 + $0xf0] sm:$0xff] %v1127
        %1160 = vst [vmem:[#allocation2 + $0xf8] sm:$0xff] %v1128
        %p1161 = scmp.eq.s32.totalorder %s30, 1
        // Predicated region
        $region57: #{tpu_custom_call.1} parent=39 // pred_check
          %p1162 = pneg %p1161
        $region58: #{tpu_custom_call.1} parent=39 // pred_check_branch
          %1164 = sbr.rel (%p1162) target = $region60
        $region59: #{tpu_custom_call.1} parent=39 // pred_region
          %v1165 = vld [vmem:[#allocation2] sm:$0xff]
          %v1166 = vld [vmem:[#allocation2 + $0x8] sm:$0xff]
          %v1167 = vld [vmem:[#allocation2 + $0x10] sm:$0xff]
          %v1168 = vld [vmem:[#allocation2 + $0x18] sm:$0xff]
          %v1169 = vld [vmem:[#allocation2 + $0x20] sm:$0xff]
          %v1170 = vld [vmem:[#allocation2 + $0x28] sm:$0xff]
          %v1171 = vld [vmem:[#allocation2 + $0x30] sm:$0xff]
          %v1172 = vld [vmem:[#allocation2 + $0x38] sm:$0xff]
          %v1173 = vld [vmem:[#allocation2 + $0x40] sm:$0xff]
          %v1174 = vld [vmem:[#allocation2 + $0x48] sm:$0xff]
          %v1175 = vld [vmem:[#allocation2 + $0x50] sm:$0xff]
          %v1176 = vld [vmem:[#allocation2 + $0x58] sm:$0xff]
          %v1177 = vld [vmem:[#allocation2 + $0x60] sm:$0xff]
          %v1178 = vld [vmem:[#allocation2 + $0x68] sm:$0xff]
          %v1179 = vld [vmem:[#allocation2 + $0x70] sm:$0xff]
          %v1180 = vld [vmem:[#allocation2 + $0x78] sm:$0xff]
          %v1181 = vld [vmem:[#allocation2 + $0x80] sm:$0xff]
          %v1182 = vld [vmem:[#allocation2 + $0x88] sm:$0xff]
          %v1183 = vld [vmem:[#allocation2 + $0x90] sm:$0xff]
          %v1184 = vld [vmem:[#allocation2 + $0x98] sm:$0xff]
          %v1185 = vld [vmem:[#allocation2 + $0xa0] sm:$0xff]
          %v1186 = vld [vmem:[#allocation2 + $0xa8] sm:$0xff]
          %v1187 = vld [vmem:[#allocation2 + $0xb0] sm:$0xff]
          %v1188 = vld [vmem:[#allocation2 + $0xb8] sm:$0xff]
          %v1189 = vld [vmem:[#allocation2 + $0xc0] sm:$0xff]
          %v1190 = vld [vmem:[#allocation2 + $0xc8] sm:$0xff]
          %v1191 = vld [vmem:[#allocation2 + $0xd0] sm:$0xff]
          %v1192 = vld [vmem:[#allocation2 + $0xd8] sm:$0xff]
          %v1193 = vld [vmem:[#allocation2 + $0xe0] sm:$0xff]
          %v1194 = vld [vmem:[#allocation2 + $0xe8] sm:$0xff]
          %v1195 = vld [vmem:[#allocation2 + $0xf0] sm:$0xff]
          %v1196 = vld [vmem:[#allocation2 + $0xf8] sm:$0xff]
          %v1197 = vld [vmem:[%s4] sm:$0x1]
          %v1199 = vlaneseq
          %v1200 = vshrl.u32 %v1199, 7
          %v1201 = vsub.s32 0, %v1200
          %v1202 = vrot.slane %v1197, %v1201
          %v1204 = vadd.f32 %v1165, %v1202
          %v1205 = vadd.f32 %v1166, %v1202
          %v1206 = vadd.f32 %v1167, %v1202
          %v1207 = vadd.f32 %v1168, %v1202
          %v1208 = vadd.f32 %v1169, %v1202
          %v1209 = vadd.f32 %v1170, %v1202
          %v1210 = vadd.f32 %v1171, %v1202
          %v1211 = vadd.f32 %v1172, %v1202
          %v1212 = vadd.f32 %v1173, %v1202
          %v1213 = vadd.f32 %v1174, %v1202
          %v1214 = vadd.f32 %v1175, %v1202
          %v1215 = vadd.f32 %v1176, %v1202
          %v1216 = vadd.f32 %v1177, %v1202
          %v1217 = vadd.f32 %v1178, %v1202
          %v1218 = vadd.f32 %v1179, %v1202
          %v1219 = vadd.f32 %v1180, %v1202
          %v1220 = vadd.f32 %v1181, %v1202
          %v1221 = vadd.f32 %v1182, %v1202
          %v1222 = vadd.f32 %v1183, %v1202
          %v1223 = vadd.f32 %v1184, %v1202
          %v1224 = vadd.f32 %v1185, %v1202
          %v1225 = vadd.f32 %v1186, %v1202
          %v1226 = vadd.f32 %v1187, %v1202
          %v1227 = vadd.f32 %v1188, %v1202
          %v1228 = vadd.f32 %v1189, %v1202
          %v1229 = vadd.f32 %v1190, %v1202
          %v1230 = vadd.f32 %v1191, %v1202
          %v1231 = vadd.f32 %v1192, %v1202
          %v1232 = vadd.f32 %v1193, %v1202
          %v1233 = vadd.f32 %v1194, %v1202
          %v1234 = vadd.f32 %v1195, %v1202
          %v1235 = vadd.f32 %v1196, %v1202
          %1236 = vst [vmem:[%s341] sm:$0xff] %v1204
          %1237 = vst [vmem:[%s341 + $0x8] sm:$0xff] %v1205
          %1238 = vst [vmem:[%s341 + $0x10] sm:$0xff] %v1206
          %1239 = vst [vmem:[%s341 + $0x18] sm:$0xff] %v1207
          %1240 = vst [vmem:[%s341 + $0x20] sm:$0xff] %v1208
          %1241 = vst [vmem:[%s341 + $0x28] sm:$0xff] %v1209
          %1242 = vst [vmem:[%s341 + $0x30] sm:$0xff] %v1210
          %1243 = vst [vmem:[%s341 + $0x38] sm:$0xff] %v1211
          %1244 = vst [vmem:[%s341 + $0x40] sm:$0xff] %v1212
          %1245 = vst [vmem:[%s341 + $0x48] sm:$0xff] %v1213
          %1246 = vst [vmem:[%s341 + $0x50] sm:$0xff] %v1214
          %1247 = vst [vmem:[%s341 + $0x58] sm:$0xff] %v1215
          %1248 = vst [vmem:[%s341 + $0x60] sm:$0xff] %v1216
          %1249 = vst [vmem:[%s341 + $0x68] sm:$0xff] %v1217
          %1250 = vst [vmem:[%s341 + $0x70] sm:$0xff] %v1218
          %1251 = vst [vmem:[%s341 + $0x78] sm:$0xff] %v1219
          %1252 = vst [vmem:[%s341 + $0x80] sm:$0xff] %v1220
          %1253 = vst [vmem:[%s341 + $0x88] sm:$0xff] %v1221
          %1254 = vst [vmem:[%s341 + $0x90] sm:$0xff] %v1222
          %1255 = vst [vmem:[%s341 + $0x98] sm:$0xff] %v1223
          %1256 = vst [vmem:[%s341 + $0xa0] sm:$0xff] %v1224
          %1257 = vst [vmem:[%s341 + $0xa8] sm:$0xff] %v1225
          %1258 = vst [vmem:[%s341 + $0xb0] sm:$0xff] %v1226
          %1259 = vst [vmem:[%s341 + $0xb8] sm:$0xff] %v1227
          %1260 = vst [vmem:[%s341 + $0xc0] sm:$0xff] %v1228
          %1261 = vst [vmem:[%s341 + $0xc8] sm:$0xff] %v1229
          %1262 = vst [vmem:[%s341 + $0xd0] sm:$0xff] %v1230
          %1263 = vst [vmem:[%s341 + $0xd8] sm:$0xff] %v1231
          %1264 = vst [vmem:[%s341 + $0xe0] sm:$0xff] %v1232
          %1265 = vst [vmem:[%s341 + $0xe8] sm:$0xff] %v1233
          %1266 = vst [vmem:[%s341 + $0xf0] sm:$0xff] %v1234
          %1267 = vst [vmem:[%s341 + $0xf8] sm:$0xff] %v1235
        $region60: #{tpu_custom_call.1} parent=39 // pred_fallthru
          _
        %s1268 = sand.u32 %s170, 1
        %s1269 = scalar_lea.sflag [#allocation5], %s1268
        %s1270 = sand.u32 %s170, 1
        %s1271 = smul.addr %s1270, 256
        %s1272 = scalar_lea.vmem [#allocation9], %s1271
        // Predicated region
        $region61: #{tpu_custom_call.1} parent=39 // pred_check
          %p1273 = pneg %p180
        $region62: #{tpu_custom_call.1} parent=39 // pred_check_branch
          %1275 = sbr.rel (%p1273) target = $region64
        $region63: #{tpu_custom_call.1} parent=39 // pred_region
          %s1276 = smul.u32 32, %s29
          %s1278 = ssub.s32 4096, 4096
          %1279 = vsyncadd %s1269, %s1278
          %s1280 = smul.addr %s1276, 128
          %s1281 = scalar_lea.hbm %s5, %s1280
          %s1282 = sshll.u32 %s1272, 4
          %s1283 = int_to_ptr.vmem [resolvable:$true] %s1282
          %1288 = dma.vmem_to_hbm [thread:$0]  %s1283, 4096, %s1281, %s1269, 128, 128, 8
        $region64: #{tpu_custom_call.1} parent=39 // pred_fallthru
          _
      $region40: #{tpu_custom_call.1} parent=5 // pred_fallthru
        _
      %p1289 = scmp.le.s32.totalorder 2, %s20
      // Predicated region
      $region65: #{tpu_custom_call.1} parent=5 // pred_check
        %p1290 = pneg %p1289
      $region66: #{tpu_custom_call.1} parent=5 // pred_check_branch
        %1292 = sbr.rel (%p1290) target = $region68
      $region67: #{tpu_custom_call.1} parent=5 // pred_region
        %s1293 = ssub.s32 %s20, 2
        // Predicated region
        $region69: #{tpu_custom_call.1} parent=67 // pred_check
          %p1294 = pneg %p186
        $region70: #{tpu_custom_call.1} parent=67 // pred_check_branch
          %1296 = sbr.rel (%p1294) target = $region72
        $region71: #{tpu_custom_call.1} parent=67 // pred_region
          %s1297 = sand.u32 %s171, 1
          %s1298 = scalar_lea.sflag [#allocation5], %s1297
          %s1299 = sand.u32 %s171, 1
          %s1300 = smul.addr %s1299, 256
          %s1301 = scalar_lea.vmem [#allocation9], %s1300
          %1302 = dma.done %s1298, 4096
        $region72: #{tpu_custom_call.1} parent=67 // pred_fallthru
          _
      $region68: #{tpu_custom_call.1} parent=5 // pred_fallthru
        _
    $region6: #{tpu_custom_call.1} parent=1 // loop_footer
      %s24 = sadd.s32 1, %s20
    $region7: #{tpu_custom_call.1} parent=1 // loop_footer_branch
      %19 = sbr.rel target = $region3
    $region8: #{tpu_custom_call.1} parent=1 // loop_exit
      _
    %1303 = vsyncpa [#allocation4], 1
    %s1304 = scalar_lea.sflag [#allocation4], 1
    %1305 = vsyncpa %s1304, 1
    %1306 = vsyncpa [#allocation7], 1
    %s1307 = scalar_lea.sflag [#allocation7], 1
    %1308 = vsyncpa %s1307, 1
    %1309 = vsyncpa [#allocation5], 1
    %s1310 = scalar_lea.sflag [#allocation5], 1
    %1311 = vsyncpa %s1310, 1

</llo_original>
